<compile_context>
chip_gen: v7x
topology: tpu7x:2x2x1
jax: 0.10.0
libtpu: 0.0.40
codegen_flags: <defaults>
</compile_context>

<pallas_src>
import jax
import jax.numpy as jnp
from jax.experimental import pallas as pl
from jax.experimental.pallas import tpu as pltpu


_EPS = 1e-6
_SQRT_2_OVER_PI = 0.7978845608028654
_LANE = 128
_TN_MAX = 8192   # (1,4,TN) f32 x {x,res,out} double-buffered ≈ 0.8 MiB: fits all gens


def _gelu(v):
    # TODO(synk): torch.nn.GELU default is erf-exact; tanh approximation used
    # (Mosaic-native EUP tanh). Deviation is small (<~1e-3).
    return 0.5 * v * (1.0 + jnp.tanh(_SQRT_2_OVER_PI * (v + 0.044715 * v * v * v)))


def _gmlp_block_kernel(x_ref, res_ref,
                       ln1g_ref, ln1b_ref, w1_ref, b1_ref,
                       ln2g_ref, ln2b_ref, wp_ref, bp_ref,
                       w2_ref, b2_ref,
                       o_ref):
    """Fused gMLP + residual on a (1, 4, TN) tile; 4 features = sublane rows."""
    xx = x_ref[0]                                    # [4, TN] f32
    x = [xx[d:d + 1, :] for d in range(4)]           # four [1, TN] planes

    quarter = jnp.float32(0.25)
    eps = jnp.float32(_EPS)

    # --- LayerNorm(4) #1 --------------------------------------------------
    mu = (x[0] + x[1] + x[2] + x[3]) * quarter
    xc = [v - mu for v in x]
    var = (xc[0] * xc[0] + xc[1] * xc[1] + xc[2] * xc[2] + xc[3] * xc[3]) * quarter
    inv = jax.lax.rsqrt(var + eps)
    h = [xc[d] * inv * ln1g_ref[d] + ln1b_ref[d] for d in range(4)]

    # --- dense1: Linear(4,4) + GELU  (result == `split` == `connection`) ---
    a = []
    for j in range(4):
        acc = h[0] * w1_ref[j, 0]
        for i in range(1, 4):
            acc = acc + h[i] * w1_ref[j, i]
        a.append(_gelu(acc + b1_ref[j]))

    # --- LayerNorm(4) #2 ----------------------------------------------------
    mu2 = (a[0] + a[1] + a[2] + a[3]) * quarter
    ac = [v - mu2 for v in a]
    var2 = (ac[0] * ac[0] + ac[1] * ac[1] + ac[2] * ac[2] + ac[3] * ac[3]) * quarter
    inv2 = jax.lax.rsqrt(var2 + eps)
    n = [ac[d] * inv2 * ln2g_ref[d] + ln2b_ref[d] for d in range(4)]

    # --- proj: Linear(4,1), broadcast gate over d, gate * connection --------
    gate = n[0] * wp_ref[0]
    for i in range(1, 4):
        gate = gate + n[i] * wp_ref[i]
    gate = gate + bp_ref[0]
    m = [gate * a[d] for d in range(4)]

    # --- dense2: Linear(4,4) + fused residual add ----------------------------
    rr = res_ref[0]                                   # [4, TN]
    outs = []
    for j in range(4):
        acc = m[0] * w2_ref[j, 0]
        for i in range(1, 4):
            acc = acc + m[i] * w2_ref[j, i]
        outs.append(acc + b2_ref[j] + rr[j:j + 1, :])
    o_ref[0] = jnp.concatenate(outs, axis=0).astype(o_ref.dtype)


def block_forward(x, params, com=None, tn_max=_TN_MAX):
    """Block.forward: (com if com is not None else x) + gMLP(x); NCHW in/out."""
    B, C, H, W = x.shape
    assert H % 2 == 0 and W % 2 == 0, "gMLP reshape requires even H and W"
    N = (C * H * W) // 4

    u = x.reshape(B, 4, N).astype(jnp.float32)
    res = (x if com is None else com).reshape(B, 4, N).astype(jnp.float32)

    # Lane-dense tiling: token index on the 128-wide lane axis.
    n_pad = -(-N // _LANE) * _LANE
    tn = min(tn_max, n_pad)
    n_pad = -(-n_pad // tn) * tn
    if n_pad != N:
        pad = n_pad - N
        u = jnp.pad(u, ((0, 0), (0, 0), (0, pad)))
        res = jnp.pad(res, ((0, 0), (0, 0), (0, pad)))

    grid = (B, n_pad // tn)
    cols = B * n_pad
    cost = pl.CostEstimate(flops=int(170 * cols),
                           transcendentals=int(6 * cols),
                           bytes_accessed=int(3 * 4 * 4 * cols))

    data_spec = pl.BlockSpec((1, 4, tn), lambda b, n: (b, 0, n))
    smem_spec = pl.BlockSpec(memory_space=pltpu.MemorySpace.SMEM)

    out = pl.pallas_call(
        _gmlp_block_kernel,
        out_shape=jax.ShapeDtypeStruct((B, 4, n_pad), jnp.float32),
        grid=grid,
        in_specs=[data_spec, data_spec] + [smem_spec] * 10,
        out_specs=data_spec,
        compiler_params=pltpu.CompilerParams(
            dimension_semantics=("parallel", "parallel")),
        cost_estimate=cost,
    )(u, res,
      params["ln1_g"], params["ln1_b"], params["w1"], params["b1"],
      params["ln2_g"], params["ln2_b"], params["wp"].reshape(4), params["bp"],
      params["w2"], params["b2"])

    if n_pad != N:
        out = out[:, :, :N]
    return out.reshape(B, C, H, W)


# --------------------------------------------------------------------------
# Pure-JAX reference mirroring the PyTorch module op-for-op (for verification)
# --------------------------------------------------------------------------

def _layernorm_ref(v, g, b, eps=_EPS):
    mu = jnp.mean(v, axis=-1, keepdims=True)
    var = jnp.mean((v - mu) ** 2, axis=-1, keepdims=True)
    return (v - mu) * jax.lax.rsqrt(var + eps) * g + b


def block_reference(x, p, com=None):
    B, C, H, W = x.shape
    H2, W2 = H // 2, W // 2
    t = x.reshape(B, 4, C, H2, W2)
    t = jnp.transpose(t, (0, 3, 4, 2, 1)).reshape(B, H2 * W2, C, 4)
    t = _layernorm_ref(t, p["ln1_g"], p["ln1_b"])
    t = t @ p["w1"].T + p["b1"]
    t = _gelu(t)
    connection = t
    s = _layernorm_ref(t, p["ln2_g"], p["ln2_b"])
    gate = s @ p["wp"].T + p["bp"]            # [B,S,C,1] -> broadcast (== repeat d=4)
    t = gate * connection
    t = t @ p["w2"].T + p["b2"]
    y = jnp.transpose(t, (0, 3, 2, 1)).reshape(B, C, H, W)
    base = x if com is None else com
    return base + y


# --------------------------------------------------------------------------
if __name__ == "__main__":
    key = jax.random.PRNGKey(0)
    keys = jax.random.split(key, 12)

    B, C, H, W = 2, 4, 16, 16
    x = jax.random.normal(keys[0], (B, C, H, W), dtype=jnp.float32)
    com = jax.random.normal(keys[1], (B, C, H, W), dtype=jnp.float32)

    def nrm(k, shape, scale=0.5):
        return (scale * jax.random.normal(k, shape)).astype(jnp.float32)

    params = {
        "ln1_g": 1.0 + nrm(keys[2], (4,), 0.1),
        "ln1_b": nrm(keys[3], (4,), 0.1),
        "w1":    nrm(keys[4], (4, 4)),
        "b1":    nrm(keys[5], (4,), 0.1),
        "ln2_g": 1.0 + nrm(keys[6], (4,), 0.1),
        "ln2_b": nrm(keys[7], (4,), 0.1),
        "wp":    nrm(keys[8], (1, 4)),
        "bp":    nrm(keys[9], (1,), 0.1),
        "w2":    nrm(keys[10], (4, 4)),
        "b2":    nrm(keys[11], (4,), 0.1),
    }

    out = jax.block_until_ready(block_forward(x, params))
    out_com = jax.block_until_ready(block_forward(x, params, com=com))

    ref = block_reference(x, params)
    ref_com = block_reference(x, params, com=com)

    assert out.shape == (B, C, H, W), out.shape
    assert bool(jnp.all(jnp.isfinite(out)))
    assert bool(jnp.allclose(out, ref, rtol=1e-4, atol=1e-4)), \
        float(jnp.max(jnp.abs(out - ref)))
    assert bool(jnp.allclose(out_com, ref_com, rtol=1e-4, atol=1e-4)), \
        float(jnp.max(jnp.abs(out_com - ref_com)))
    print("KERNEL_OK")
</pallas_src>

<mosaic_0001>
module attributes {stable_mosaic.version = 11 : i64} {
  func.func @_gmlp_block_kernel(%arg0: i32, %arg1: i32, %arg2: memref<1x4x256xf32, #tpu.memory_space<vmem>>, %arg3: memref<1x4x256xf32, #tpu.memory_space<vmem>>, %arg4: memref<4xf32, #tpu.memory_space<smem>>, %arg5: memref<4xf32, #tpu.memory_space<smem>>, %arg6: memref<4x4xf32, #tpu.memory_space<smem>>, %arg7: memref<4xf32, #tpu.memory_space<smem>>, %arg8: memref<4xf32, #tpu.memory_space<smem>>, %arg9: memref<4xf32, #tpu.memory_space<smem>>, %arg10: memref<4xf32, #tpu.memory_space<smem>>, %arg11: memref<1xf32, #tpu.memory_space<smem>>, %arg12: memref<4x4xf32, #tpu.memory_space<smem>>, %arg13: memref<4xf32, #tpu.memory_space<smem>>, %arg14: memref<1x4x256xf32, #tpu.memory_space<vmem>>) attributes {dimension_semantics = [#tpu.dimension_semantics<parallel>, #tpu.dimension_semantics<parallel>], iteration_bounds = array<i64: 2, 1>, scalar_prefetch = 0 : i64, scratch_operands = 0 : i64, tpu.core_type = #tpu.core_type<tc>, window_params = [{transform_indices = @transform_0, window_bounds = array<i64: 1, 4, 256>}, {transform_indices = @transform_1, window_bounds = array<i64: 1, 4, 256>}, {transform_indices = @transform_2, window_bounds = array<i64: 4>}, {transform_indices = @transform_3, window_bounds = array<i64: 4>}, {transform_indices = @transform_4, window_bounds = array<i64: 4, 4>}, {transform_indices = @transform_5, window_bounds = array<i64: 4>}, {transform_indices = @transform_6, window_bounds = array<i64: 4>}, {transform_indices = @transform_7, window_bounds = array<i64: 4>}, {transform_indices = @transform_8, window_bounds = array<i64: 4>}, {transform_indices = @transform_9, window_bounds = array<i64: 1>}, {transform_indices = @transform_10, window_bounds = array<i64: 4, 4>}, {transform_indices = @transform_11, window_bounds = array<i64: 4>}, {transform_indices = @transform_12, window_bounds = array<i64: 1, 4, 256>}]} {
    %c0 = arith.constant 0 : index
    %c0_0 = arith.constant 0 : index
    %c0_1 = arith.constant 0 : index
    %0 = vector.load %arg2[%c0, %c0_0, %c0_1] : memref<1x4x256xf32, #tpu.memory_space<vmem>>, vector<1x4x256xf32>
    %1 = vector.shape_cast %0 : vector<1x4x256xf32> to vector<4x256xf32>
    %2 = vector.extract_strided_slice %1 {offsets = [0, 0], sizes = [1, 256], strides = [1, 1]} : vector<4x256xf32> to vector<1x256xf32>
    %3 = vector.extract_strided_slice %1 {offsets = [1, 0], sizes = [1, 256], strides = [1, 1]} : vector<4x256xf32> to vector<1x256xf32>
    %4 = vector.extract_strided_slice %1 {offsets = [2, 0], sizes = [1, 256], strides = [1, 1]} : vector<4x256xf32> to vector<1x256xf32>
    %5 = vector.extract_strided_slice %1 {offsets = [3, 0], sizes = [1, 256], strides = [1, 1]} : vector<4x256xf32> to vector<1x256xf32>
    %6 = arith.addf %2, %3 : vector<1x256xf32>
    %7 = arith.addf %6, %4 : vector<1x256xf32>
    %8 = arith.addf %7, %5 : vector<1x256xf32>
    %cst = arith.constant 2.500000e-01 : f32
    %9 = vector.broadcast %cst : f32 to vector<1x256xf32>
    %10 = arith.mulf %8, %9 : vector<1x256xf32>
    %11 = arith.subf %2, %10 : vector<1x256xf32>
    %12 = arith.subf %3, %10 : vector<1x256xf32>
    %13 = arith.subf %4, %10 : vector<1x256xf32>
    %14 = arith.subf %5, %10 : vector<1x256xf32>
    %15 = arith.mulf %11, %11 : vector<1x256xf32>
    %16 = arith.mulf %12, %12 : vector<1x256xf32>
    %17 = arith.addf %15, %16 : vector<1x256xf32>
    %18 = arith.mulf %13, %13 : vector<1x256xf32>
    %19 = arith.addf %17, %18 : vector<1x256xf32>
    %20 = arith.mulf %14, %14 : vector<1x256xf32>
    %21 = arith.addf %19, %20 : vector<1x256xf32>
    %cst_2 = arith.constant 2.500000e-01 : f32
    %22 = vector.broadcast %cst_2 : f32 to vector<1x256xf32>
    %23 = arith.mulf %21, %22 : vector<1x256xf32>
    %cst_3 = arith.constant 9.99999997E-7 : f32
    %24 = vector.broadcast %cst_3 : f32 to vector<1x256xf32>
    %25 = arith.addf %23, %24 : vector<1x256xf32>
    %26 = math.rsqrt %25 : vector<1x256xf32>
    %27 = arith.mulf %11, %26 : vector<1x256xf32>
    %c0_4 = arith.constant 0 : index
    %28 = memref.load %arg4[%c0_4] : memref<4xf32, #tpu.memory_space<smem>>
    %29 = vector.broadcast %28 : f32 to vector<1x256xf32>
    %30 = arith.mulf %27, %29 : vector<1x256xf32>
    %c0_5 = arith.constant 0 : index
    %31 = memref.load %arg5[%c0_5] : memref<4xf32, #tpu.memory_space<smem>>
    %32 = vector.broadcast %31 : f32 to vector<1x256xf32>
    %33 = arith.addf %30, %32 : vector<1x256xf32>
    %34 = arith.mulf %12, %26 : vector<1x256xf32>
    %c1 = arith.constant 1 : index
    %35 = memref.load %arg4[%c1] : memref<4xf32, #tpu.memory_space<smem>>
    %36 = vector.broadcast %35 : f32 to vector<1x256xf32>
    %37 = arith.mulf %34, %36 : vector<1x256xf32>
    %c1_6 = arith.constant 1 : index
    %38 = memref.load %arg5[%c1_6] : memref<4xf32, #tpu.memory_space<smem>>
    %39 = vector.broadcast %38 : f32 to vector<1x256xf32>
    %40 = arith.addf %37, %39 : vector<1x256xf32>
    %41 = arith.mulf %13, %26 : vector<1x256xf32>
    %c2 = arith.constant 2 : index
    %42 = memref.load %arg4[%c2] : memref<4xf32, #tpu.memory_space<smem>>
    %43 = vector.broadcast %42 : f32 to vector<1x256xf32>
    %44 = arith.mulf %41, %43 : vector<1x256xf32>
    %c2_7 = arith.constant 2 : index
    %45 = memref.load %arg5[%c2_7] : memref<4xf32, #tpu.memory_space<smem>>
    %46 = vector.broadcast %45 : f32 to vector<1x256xf32>
    %47 = arith.addf %44, %46 : vector<1x256xf32>
    %48 = arith.mulf %14, %26 : vector<1x256xf32>
    %c3 = arith.constant 3 : index
    %49 = memref.load %arg4[%c3] : memref<4xf32, #tpu.memory_space<smem>>
    %50 = vector.broadcast %49 : f32 to vector<1x256xf32>
    %51 = arith.mulf %48, %50 : vector<1x256xf32>
    %c3_8 = arith.constant 3 : index
    %52 = memref.load %arg5[%c3_8] : memref<4xf32, #tpu.memory_space<smem>>
    %53 = vector.broadcast %52 : f32 to vector<1x256xf32>
    %54 = arith.addf %51, %53 : vector<1x256xf32>
    %c0_9 = arith.constant 0 : index
    %c0_10 = arith.constant 0 : index
    %55 = memref.load %arg6[%c0_9, %c0_10] : memref<4x4xf32, #tpu.memory_space<smem>>
    %56 = vector.broadcast %55 : f32 to vector<1x256xf32>
    %57 = arith.mulf %33, %56 : vector<1x256xf32>
    %c0_11 = arith.constant 0 : index
    %c1_12 = arith.constant 1 : index
    %58 = memref.load %arg6[%c0_11, %c1_12] : memref<4x4xf32, #tpu.memory_space<smem>>
    %59 = vector.broadcast %58 : f32 to vector<1x256xf32>
    %60 = arith.mulf %40, %59 : vector<1x256xf32>
    %61 = arith.addf %57, %60 : vector<1x256xf32>
    %c0_13 = arith.constant 0 : index
    %c2_14 = arith.constant 2 : index
    %62 = memref.load %arg6[%c0_13, %c2_14] : memref<4x4xf32, #tpu.memory_space<smem>>
    %63 = vector.broadcast %62 : f32 to vector<1x256xf32>
    %64 = arith.mulf %47, %63 : vector<1x256xf32>
    %65 = arith.addf %61, %64 : vector<1x256xf32>
    %c0_15 = arith.constant 0 : index
    %c3_16 = arith.constant 3 : index
    %66 = memref.load %arg6[%c0_15, %c3_16] : memref<4x4xf32, #tpu.memory_space<smem>>
    %67 = vector.broadcast %66 : f32 to vector<1x256xf32>
    %68 = arith.mulf %54, %67 : vector<1x256xf32>
    %69 = arith.addf %65, %68 : vector<1x256xf32>
    %c0_17 = arith.constant 0 : index
    %70 = memref.load %arg7[%c0_17] : memref<4xf32, #tpu.memory_space<smem>>
    %71 = vector.broadcast %70 : f32 to vector<1x256xf32>
    %72 = arith.addf %69, %71 : vector<1x256xf32>
    %cst_18 = arith.constant 5.000000e-01 : f32
    %73 = vector.broadcast %cst_18 : f32 to vector<1x256xf32>
    %74 = arith.mulf %73, %72 : vector<1x256xf32>
    %cst_19 = arith.constant 4.471500e-02 : f32
    %75 = vector.broadcast %cst_19 : f32 to vector<1x256xf32>
    %76 = arith.mulf %75, %72 : vector<1x256xf32>
    %77 = arith.mulf %76, %72 : vector<1x256xf32>
    %78 = arith.mulf %77, %72 : vector<1x256xf32>
    %79 = arith.addf %72, %78 : vector<1x256xf32>
    %cst_20 = arith.constant 0.797884583 : f32
    %80 = vector.broadcast %cst_20 : f32 to vector<1x256xf32>
    %81 = arith.mulf %80, %79 : vector<1x256xf32>
    %82 = math.tanh %81 : vector<1x256xf32>
    %cst_21 = arith.constant 1.000000e+00 : f32
    %83 = vector.broadcast %cst_21 : f32 to vector<1x256xf32>
    %84 = arith.addf %83, %82 : vector<1x256xf32>
    %85 = arith.mulf %74, %84 : vector<1x256xf32>
    %c1_22 = arith.constant 1 : index
    %c0_23 = arith.constant 0 : index
    %86 = memref.load %arg6[%c1_22, %c0_23] : memref<4x4xf32, #tpu.memory_space<smem>>
    %87 = vector.broadcast %86 : f32 to vector<1x256xf32>
    %88 = arith.mulf %33, %87 : vector<1x256xf32>
    %c1_24 = arith.constant 1 : index
    %c1_25 = arith.constant 1 : index
    %89 = memref.load %arg6[%c1_24, %c1_25] : memref<4x4xf32, #tpu.memory_space<smem>>
    %90 = vector.broadcast %89 : f32 to vector<1x256xf32>
    %91 = arith.mulf %40, %90 : vector<1x256xf32>
    %92 = arith.addf %88, %91 : vector<1x256xf32>
    %c1_26 = arith.constant 1 : index
    %c2_27 = arith.constant 2 : index
    %93 = memref.load %arg6[%c1_26, %c2_27] : memref<4x4xf32, #tpu.memory_space<smem>>
    %94 = vector.broadcast %93 : f32 to vector<1x256xf32>
    %95 = arith.mulf %47, %94 : vector<1x256xf32>
    %96 = arith.addf %92, %95 : vector<1x256xf32>
    %c1_28 = arith.constant 1 : index
    %c3_29 = arith.constant 3 : index
    %97 = memref.load %arg6[%c1_28, %c3_29] : memref<4x4xf32, #tpu.memory_space<smem>>
    %98 = vector.broadcast %97 : f32 to vector<1x256xf32>
    %99 = arith.mulf %54, %98 : vector<1x256xf32>
    %100 = arith.addf %96, %99 : vector<1x256xf32>
    %c1_30 = arith.constant 1 : index
    %101 = memref.load %arg7[%c1_30] : memref<4xf32, #tpu.memory_space<smem>>
    %102 = vector.broadcast %101 : f32 to vector<1x256xf32>
    %103 = arith.addf %100, %102 : vector<1x256xf32>
    %cst_31 = arith.constant 5.000000e-01 : f32
    %104 = vector.broadcast %cst_31 : f32 to vector<1x256xf32>
    %105 = arith.mulf %104, %103 : vector<1x256xf32>
    %cst_32 = arith.constant 4.471500e-02 : f32
    %106 = vector.broadcast %cst_32 : f32 to vector<1x256xf32>
    %107 = arith.mulf %106, %103 : vector<1x256xf32>
    %108 = arith.mulf %107, %103 : vector<1x256xf32>
    %109 = arith.mulf %108, %103 : vector<1x256xf32>
    %110 = arith.addf %103, %109 : vector<1x256xf32>
    %cst_33 = arith.constant 0.797884583 : f32
    %111 = vector.broadcast %cst_33 : f32 to vector<1x256xf32>
    %112 = arith.mulf %111, %110 : vector<1x256xf32>
    %113 = math.tanh %112 : vector<1x256xf32>
    %cst_34 = arith.constant 1.000000e+00 : f32
    %114 = vector.broadcast %cst_34 : f32 to vector<1x256xf32>
    %115 = arith.addf %114, %113 : vector<1x256xf32>
    %116 = arith.mulf %105, %115 : vector<1x256xf32>
    %c2_35 = arith.constant 2 : index
    %c0_36 = arith.constant 0 : index
    %117 = memref.load %arg6[%c2_35, %c0_36] : memref<4x4xf32, #tpu.memory_space<smem>>
    %118 = vector.broadcast %117 : f32 to vector<1x256xf32>
    %119 = arith.mulf %33, %118 : vector<1x256xf32>
    %c2_37 = arith.constant 2 : index
    %c1_38 = arith.constant 1 : index
    %120 = memref.load %arg6[%c2_37, %c1_38] : memref<4x4xf32, #tpu.memory_space<smem>>
    %121 = vector.broadcast %120 : f32 to vector<1x256xf32>
    %122 = arith.mulf %40, %121 : vector<1x256xf32>
    %123 = arith.addf %119, %122 : vector<1x256xf32>
    %c2_39 = arith.constant 2 : index
    %c2_40 = arith.constant 2 : index
    %124 = memref.load %arg6[%c2_39, %c2_40] : memref<4x4xf32, #tpu.memory_space<smem>>
    %125 = vector.broadcast %124 : f32 to vector<1x256xf32>
    %126 = arith.mulf %47, %125 : vector<1x256xf32>
    %127 = arith.addf %123, %126 : vector<1x256xf32>
    %c2_41 = arith.constant 2 : index
    %c3_42 = arith.constant 3 : index
    %128 = memref.load %arg6[%c2_41, %c3_42] : memref<4x4xf32, #tpu.memory_space<smem>>
    %129 = vector.broadcast %128 : f32 to vector<1x256xf32>
    %130 = arith.mulf %54, %129 : vector<1x256xf32>
    %131 = arith.addf %127, %130 : vector<1x256xf32>
    %c2_43 = arith.constant 2 : index
    %132 = memref.load %arg7[%c2_43] : memref<4xf32, #tpu.memory_space<smem>>
    %133 = vector.broadcast %132 : f32 to vector<1x256xf32>
    %134 = arith.addf %131, %133 : vector<1x256xf32>
    %cst_44 = arith.constant 5.000000e-01 : f32
    %135 = vector.broadcast %cst_44 : f32 to vector<1x256xf32>
    %136 = arith.mulf %135, %134 : vector<1x256xf32>
    %cst_45 = arith.constant 4.471500e-02 : f32
    %137 = vector.broadcast %cst_45 : f32 to vector<1x256xf32>
    %138 = arith.mulf %137, %134 : vector<1x256xf32>
    %139 = arith.mulf %138, %134 : vector<1x256xf32>
    %140 = arith.mulf %139, %134 : vector<1x256xf32>
    %141 = arith.addf %134, %140 : vector<1x256xf32>
    %cst_46 = arith.constant 0.797884583 : f32
    %142 = vector.broadcast %cst_46 : f32 to vector<1x256xf32>
    %143 = arith.mulf %142, %141 : vector<1x256xf32>
    %144 = math.tanh %143 : vector<1x256xf32>
    %cst_47 = arith.constant 1.000000e+00 : f32
    %145 = vector.broadcast %cst_47 : f32 to vector<1x256xf32>
    %146 = arith.addf %145, %144 : vector<1x256xf32>
    %147 = arith.mulf %136, %146 : vector<1x256xf32>
    %c3_48 = arith.constant 3 : index
    %c0_49 = arith.constant 0 : index
    %148 = memref.load %arg6[%c3_48, %c0_49] : memref<4x4xf32, #tpu.memory_space<smem>>
    %149 = vector.broadcast %148 : f32 to vector<1x256xf32>
    %150 = arith.mulf %33, %149 : vector<1x256xf32>
    %c3_50 = arith.constant 3 : index
    %c1_51 = arith.constant 1 : index
    %151 = memref.load %arg6[%c3_50, %c1_51] : memref<4x4xf32, #tpu.memory_space<smem>>
    %152 = vector.broadcast %151 : f32 to vector<1x256xf32>
    %153 = arith.mulf %40, %152 : vector<1x256xf32>
    %154 = arith.addf %150, %153 : vector<1x256xf32>
    %c3_52 = arith.constant 3 : index
    %c2_53 = arith.constant 2 : index
    %155 = memref.load %arg6[%c3_52, %c2_53] : memref<4x4xf32, #tpu.memory_space<smem>>
    %156 = vector.broadcast %155 : f32 to vector<1x256xf32>
    %157 = arith.mulf %47, %156 : vector<1x256xf32>
    %158 = arith.addf %154, %157 : vector<1x256xf32>
    %c3_54 = arith.constant 3 : index
    %c3_55 = arith.constant 3 : index
    %159 = memref.load %arg6[%c3_54, %c3_55] : memref<4x4xf32, #tpu.memory_space<smem>>
    %160 = vector.broadcast %159 : f32 to vector<1x256xf32>
    %161 = arith.mulf %54, %160 : vector<1x256xf32>
    %162 = arith.addf %158, %161 : vector<1x256xf32>
    %c3_56 = arith.constant 3 : index
    %163 = memref.load %arg7[%c3_56] : memref<4xf32, #tpu.memory_space<smem>>
    %164 = vector.broadcast %163 : f32 to vector<1x256xf32>
    %165 = arith.addf %162, %164 : vector<1x256xf32>
    %cst_57 = arith.constant 5.000000e-01 : f32
    %166 = vector.broadcast %cst_57 : f32 to vector<1x256xf32>
    %167 = arith.mulf %166, %165 : vector<1x256xf32>
    %cst_58 = arith.constant 4.471500e-02 : f32
    %168 = vector.broadcast %cst_58 : f32 to vector<1x256xf32>
    %169 = arith.mulf %168, %165 : vector<1x256xf32>
    %170 = arith.mulf %169, %165 : vector<1x256xf32>
    %171 = arith.mulf %170, %165 : vector<1x256xf32>
    %172 = arith.addf %165, %171 : vector<1x256xf32>
    %cst_59 = arith.constant 0.797884583 : f32
    %173 = vector.broadcast %cst_59 : f32 to vector<1x256xf32>
    %174 = arith.mulf %173, %172 : vector<1x256xf32>
    %175 = math.tanh %174 : vector<1x256xf32>
    %cst_60 = arith.constant 1.000000e+00 : f32
    %176 = vector.broadcast %cst_60 : f32 to vector<1x256xf32>
    %177 = arith.addf %176, %175 : vector<1x256xf32>
    %178 = arith.mulf %167, %177 : vector<1x256xf32>
    %179 = arith.addf %85, %116 : vector<1x256xf32>
    %180 = arith.addf %179, %147 : vector<1x256xf32>
    %181 = arith.addf %180, %178 : vector<1x256xf32>
    %cst_61 = arith.constant 2.500000e-01 : f32
    %182 = vector.broadcast %cst_61 : f32 to vector<1x256xf32>
    %183 = arith.mulf %181, %182 : vector<1x256xf32>
    %184 = arith.subf %85, %183 : vector<1x256xf32>
    %185 = arith.subf %116, %183 : vector<1x256xf32>
    %186 = arith.subf %147, %183 : vector<1x256xf32>
    %187 = arith.subf %178, %183 : vector<1x256xf32>
    %188 = arith.mulf %184, %184 : vector<1x256xf32>
    %189 = arith.mulf %185, %185 : vector<1x256xf32>
    %190 = arith.addf %188, %189 : vector<1x256xf32>
    %191 = arith.mulf %186, %186 : vector<1x256xf32>
    %192 = arith.addf %190, %191 : vector<1x256xf32>
    %193 = arith.mulf %187, %187 : vector<1x256xf32>
    %194 = arith.addf %192, %193 : vector<1x256xf32>
    %cst_62 = arith.constant 2.500000e-01 : f32
    %195 = vector.broadcast %cst_62 : f32 to vector<1x256xf32>
    %196 = arith.mulf %194, %195 : vector<1x256xf32>
    %cst_63 = arith.constant 9.99999997E-7 : f32
    %197 = vector.broadcast %cst_63 : f32 to vector<1x256xf32>
    %198 = arith.addf %196, %197 : vector<1x256xf32>
    %199 = math.rsqrt %198 : vector<1x256xf32>
    %200 = arith.mulf %184, %199 : vector<1x256xf32>
    %c0_64 = arith.constant 0 : index
    %201 = memref.load %arg8[%c0_64] : memref<4xf32, #tpu.memory_space<smem>>
    %202 = vector.broadcast %201 : f32 to vector<1x256xf32>
    %203 = arith.mulf %200, %202 : vector<1x256xf32>
    %c0_65 = arith.constant 0 : index
    %204 = memref.load %arg9[%c0_65] : memref<4xf32, #tpu.memory_space<smem>>
    %205 = vector.broadcast %204 : f32 to vector<1x256xf32>
    %206 = arith.addf %203, %205 : vector<1x256xf32>
    %207 = arith.mulf %185, %199 : vector<1x256xf32>
    %c1_66 = arith.constant 1 : index
    %208 = memref.load %arg8[%c1_66] : memref<4xf32, #tpu.memory_space<smem>>
    %209 = vector.broadcast %208 : f32 to vector<1x256xf32>
    %210 = arith.mulf %207, %209 : vector<1x256xf32>
    %c1_67 = arith.constant 1 : index
    %211 = memref.load %arg9[%c1_67] : memref<4xf32, #tpu.memory_space<smem>>
    %212 = vector.broadcast %211 : f32 to vector<1x256xf32>
    %213 = arith.addf %210, %212 : vector<1x256xf32>
    %214 = arith.mulf %186, %199 : vector<1x256xf32>
    %c2_68 = arith.constant 2 : index
    %215 = memref.load %arg8[%c2_68] : memref<4xf32, #tpu.memory_space<smem>>
    %216 = vector.broadcast %215 : f32 to vector<1x256xf32>
    %217 = arith.mulf %214, %216 : vector<1x256xf32>
    %c2_69 = arith.constant 2 : index
    %218 = memref.load %arg9[%c2_69] : memref<4xf32, #tpu.memory_space<smem>>
    %219 = vector.broadcast %218 : f32 to vector<1x256xf32>
    %220 = arith.addf %217, %219 : vector<1x256xf32>
    %221 = arith.mulf %187, %199 : vector<1x256xf32>
    %c3_70 = arith.constant 3 : index
    %222 = memref.load %arg8[%c3_70] : memref<4xf32, #tpu.memory_space<smem>>
    %223 = vector.broadcast %222 : f32 to vector<1x256xf32>
    %224 = arith.mulf %221, %223 : vector<1x256xf32>
    %c3_71 = arith.constant 3 : index
    %225 = memref.load %arg9[%c3_71] : memref<4xf32, #tpu.memory_space<smem>>
    %226 = vector.broadcast %225 : f32 to vector<1x256xf32>
    %227 = arith.addf %224, %226 : vector<1x256xf32>
    %c0_72 = arith.constant 0 : index
    %228 = memref.load %arg10[%c0_72] : memref<4xf32, #tpu.memory_space<smem>>
    %229 = vector.broadcast %228 : f32 to vector<1x256xf32>
    %230 = arith.mulf %206, %229 : vector<1x256xf32>
    %c1_73 = arith.constant 1 : index
    %231 = memref.load %arg10[%c1_73] : memref<4xf32, #tpu.memory_space<smem>>
    %232 = vector.broadcast %231 : f32 to vector<1x256xf32>
    %233 = arith.mulf %213, %232 : vector<1x256xf32>
    %234 = arith.addf %230, %233 : vector<1x256xf32>
    %c2_74 = arith.constant 2 : index
    %235 = memref.load %arg10[%c2_74] : memref<4xf32, #tpu.memory_space<smem>>
    %236 = vector.broadcast %235 : f32 to vector<1x256xf32>
    %237 = arith.mulf %220, %236 : vector<1x256xf32>
    %238 = arith.addf %234, %237 : vector<1x256xf32>
    %c3_75 = arith.constant 3 : index
    %239 = memref.load %arg10[%c3_75] : memref<4xf32, #tpu.memory_space<smem>>
    %240 = vector.broadcast %239 : f32 to vector<1x256xf32>
    %241 = arith.mulf %227, %240 : vector<1x256xf32>
    %242 = arith.addf %238, %241 : vector<1x256xf32>
    %c0_76 = arith.constant 0 : index
    %243 = memref.load %arg11[%c0_76] : memref<1xf32, #tpu.memory_space<smem>>
    %244 = vector.broadcast %243 : f32 to vector<1x256xf32>
    %245 = arith.addf %242, %244 : vector<1x256xf32>
    %246 = arith.mulf %245, %85 : vector<1x256xf32>
    %247 = arith.mulf %245, %116 : vector<1x256xf32>
    %248 = arith.mulf %245, %147 : vector<1x256xf32>
    %249 = arith.mulf %245, %178 : vector<1x256xf32>
    %c0_77 = arith.constant 0 : index
    %c0_78 = arith.constant 0 : index
    %c0_79 = arith.constant 0 : index
    %250 = vector.load %arg3[%c0_77, %c0_78, %c0_79] : memref<1x4x256xf32, #tpu.memory_space<vmem>>, vector<1x4x256xf32>
    %251 = vector.shape_cast %250 : vector<1x4x256xf32> to vector<4x256xf32>
    %c0_80 = arith.constant 0 : index
    %c0_81 = arith.constant 0 : index
    %252 = memref.load %arg12[%c0_80, %c0_81] : memref<4x4xf32, #tpu.memory_space<smem>>
    %253 = vector.broadcast %252 : f32 to vector<1x256xf32>
    %254 = arith.mulf %246, %253 : vector<1x256xf32>
    %c0_82 = arith.constant 0 : index
    %c1_83 = arith.constant 1 : index
    %255 = memref.load %arg12[%c0_82, %c1_83] : memref<4x4xf32, #tpu.memory_space<smem>>
    %256 = vector.broadcast %255 : f32 to vector<1x256xf32>
    %257 = arith.mulf %247, %256 : vector<1x256xf32>
    %258 = arith.addf %254, %257 : vector<1x256xf32>
    %c0_84 = arith.constant 0 : index
    %c2_85 = arith.constant 2 : index
    %259 = memref.load %arg12[%c0_84, %c2_85] : memref<4x4xf32, #tpu.memory_space<smem>>
    %260 = vector.broadcast %259 : f32 to vector<1x256xf32>
    %261 = arith.mulf %248, %260 : vector<1x256xf32>
    %262 = arith.addf %258, %261 : vector<1x256xf32>
    %c0_86 = arith.constant 0 : index
    %c3_87 = arith.constant 3 : index
    %263 = memref.load %arg12[%c0_86, %c3_87] : memref<4x4xf32, #tpu.memory_space<smem>>
    %264 = vector.broadcast %263 : f32 to vector<1x256xf32>
    %265 = arith.mulf %249, %264 : vector<1x256xf32>
    %266 = arith.addf %262, %265 : vector<1x256xf32>
    %c0_88 = arith.constant 0 : index
    %267 = memref.load %arg13[%c0_88] : memref<4xf32, #tpu.memory_space<smem>>
    %268 = vector.broadcast %267 : f32 to vector<1x256xf32>
    %269 = arith.addf %266, %268 : vector<1x256xf32>
    %270 = vector.extract_strided_slice %251 {offsets = [0, 0], sizes = [1, 256], strides = [1, 1]} : vector<4x256xf32> to vector<1x256xf32>
    %271 = arith.addf %269, %270 : vector<1x256xf32>
    %c1_89 = arith.constant 1 : index
    %c0_90 = arith.constant 0 : index
    %272 = memref.load %arg12[%c1_89, %c0_90] : memref<4x4xf32, #tpu.memory_space<smem>>
    %273 = vector.broadcast %272 : f32 to vector<1x256xf32>
    %274 = arith.mulf %246, %273 : vector<1x256xf32>
    %c1_91 = arith.constant 1 : index
    %c1_92 = arith.constant 1 : index
    %275 = memref.load %arg12[%c1_91, %c1_92] : memref<4x4xf32, #tpu.memory_space<smem>>
    %276 = vector.broadcast %275 : f32 to vector<1x256xf32>
    %277 = arith.mulf %247, %276 : vector<1x256xf32>
    %278 = arith.addf %274, %277 : vector<1x256xf32>
    %c1_93 = arith.constant 1 : index
    %c2_94 = arith.constant 2 : index
    %279 = memref.load %arg12[%c1_93, %c2_94] : memref<4x4xf32, #tpu.memory_space<smem>>
    %280 = vector.broadcast %279 : f32 to vector<1x256xf32>
    %281 = arith.mulf %248, %280 : vector<1x256xf32>
    %282 = arith.addf %278, %281 : vector<1x256xf32>
    %c1_95 = arith.constant 1 : index
    %c3_96 = arith.constant 3 : index
    %283 = memref.load %arg12[%c1_95, %c3_96] : memref<4x4xf32, #tpu.memory_space<smem>>
    %284 = vector.broadcast %283 : f32 to vector<1x256xf32>
    %285 = arith.mulf %249, %284 : vector<1x256xf32>
    %286 = arith.addf %282, %285 : vector<1x256xf32>
    %c1_97 = arith.constant 1 : index
    %287 = memref.load %arg13[%c1_97] : memref<4xf32, #tpu.memory_space<smem>>
    %288 = vector.broadcast %287 : f32 to vector<1x256xf32>
    %289 = arith.addf %286, %288 : vector<1x256xf32>
    %290 = vector.extract_strided_slice %251 {offsets = [1, 0], sizes = [1, 256], strides = [1, 1]} : vector<4x256xf32> to vector<1x256xf32>
    %291 = arith.addf %289, %290 : vector<1x256xf32>
    %c2_98 = arith.constant 2 : index
    %c0_99 = arith.constant 0 : index
    %292 = memref.load %arg12[%c2_98, %c0_99] : memref<4x4xf32, #tpu.memory_space<smem>>
    %293 = vector.broadcast %292 : f32 to vector<1x256xf32>
    %294 = arith.mulf %246, %293 : vector<1x256xf32>
    %c2_100 = arith.constant 2 : index
    %c1_101 = arith.constant 1 : index
    %295 = memref.load %arg12[%c2_100, %c1_101] : memref<4x4xf32, #tpu.memory_space<smem>>
    %296 = vector.broadcast %295 : f32 to vector<1x256xf32>
    %297 = arith.mulf %247, %296 : vector<1x256xf32>
    %298 = arith.addf %294, %297 : vector<1x256xf32>
    %c2_102 = arith.constant 2 : index
    %c2_103 = arith.constant 2 : index
    %299 = memref.load %arg12[%c2_102, %c2_103] : memref<4x4xf32, #tpu.memory_space<smem>>
    %300 = vector.broadcast %299 : f32 to vector<1x256xf32>
    %301 = arith.mulf %248, %300 : vector<1x256xf32>
    %302 = arith.addf %298, %301 : vector<1x256xf32>
    %c2_104 = arith.constant 2 : index
    %c3_105 = arith.constant 3 : index
    %303 = memref.load %arg12[%c2_104, %c3_105] : memref<4x4xf32, #tpu.memory_space<smem>>
    %304 = vector.broadcast %303 : f32 to vector<1x256xf32>
    %305 = arith.mulf %249, %304 : vector<1x256xf32>
    %306 = arith.addf %302, %305 : vector<1x256xf32>
    %c2_106 = arith.constant 2 : index
    %307 = memref.load %arg13[%c2_106] : memref<4xf32, #tpu.memory_space<smem>>
    %308 = vector.broadcast %307 : f32 to vector<1x256xf32>
    %309 = arith.addf %306, %308 : vector<1x256xf32>
    %310 = vector.extract_strided_slice %251 {offsets = [2, 0], sizes = [1, 256], strides = [1, 1]} : vector<4x256xf32> to vector<1x256xf32>
    %311 = arith.addf %309, %310 : vector<1x256xf32>
    %c3_107 = arith.constant 3 : index
    %c0_108 = arith.constant 0 : index
    %312 = memref.load %arg12[%c3_107, %c0_108] : memref<4x4xf32, #tpu.memory_space<smem>>
    %313 = vector.broadcast %312 : f32 to vector<1x256xf32>
    %314 = arith.mulf %246, %313 : vector<1x256xf32>
    %c3_109 = arith.constant 3 : index
    %c1_110 = arith.constant 1 : index
    %315 = memref.load %arg12[%c3_109, %c1_110] : memref<4x4xf32, #tpu.memory_space<smem>>
    %316 = vector.broadcast %315 : f32 to vector<1x256xf32>
    %317 = arith.mulf %247, %316 : vector<1x256xf32>
    %318 = arith.addf %314, %317 : vector<1x256xf32>
    %c3_111 = arith.constant 3 : index
    %c2_112 = arith.constant 2 : index
    %319 = memref.load %arg12[%c3_111, %c2_112] : memref<4x4xf32, #tpu.memory_space<smem>>
    %320 = vector.broadcast %319 : f32 to vector<1x256xf32>
    %321 = arith.mulf %248, %320 : vector<1x256xf32>
    %322 = arith.addf %318, %321 : vector<1x256xf32>
    %c3_113 = arith.constant 3 : index
    %c3_114 = arith.constant 3 : index
    %323 = memref.load %arg12[%c3_113, %c3_114] : memref<4x4xf32, #tpu.memory_space<smem>>
    %324 = vector.broadcast %323 : f32 to vector<1x256xf32>
    %325 = arith.mulf %249, %324 : vector<1x256xf32>
    %326 = arith.addf %322, %325 : vector<1x256xf32>
    %c3_115 = arith.constant 3 : index
    %327 = memref.load %arg13[%c3_115] : memref<4xf32, #tpu.memory_space<smem>>
    %328 = vector.broadcast %327 : f32 to vector<1x256xf32>
    %329 = arith.addf %326, %328 : vector<1x256xf32>
    %330 = vector.extract_strided_slice %251 {offsets = [3, 0], sizes = [1, 256], strides = [1, 1]} : vector<4x256xf32> to vector<1x256xf32>
    %331 = arith.addf %329, %330 : vector<1x256xf32>
    %332 = tpu.concatenate %271, %291, %311, %331 in 0 : vector<1x256xf32>, vector<1x256xf32>, vector<1x256xf32>, vector<1x256xf32> -> vector<4x256xf32>
    %c0_116 = arith.constant 0 : index
    %c0_117 = arith.constant 0 : index
    %c0_118 = arith.constant 0 : index
    %333 = vector.load %arg14[%c0_116, %c0_117, %c0_118] : memref<1x4x256xf32, #tpu.memory_space<vmem>>, vector<1x4x256xf32>
    %334 = vector.shape_cast %333 : vector<1x4x256xf32> to vector<4x256xf32>
    %335 = vector.shape_cast %332 : vector<4x256xf32> to vector<1x4x256xf32>
    tpu.vector_store %arg14[%c0_116, %c0_117, %c0_118], %335 {strides = array<i32>} : memref<1x4x256xf32, #tpu.memory_space<vmem>>, vector<1x4x256xf32>,
    return
  }
  func.func @transform_0(%arg0: i32, %arg1: i32) -> (i32, i32, i32) {
    %c0_i32 = arith.constant 0 : i32
    %c0_i32_0 = arith.constant 0 : i32
    return %arg0, %c0_i32, %arg1 : i32, i32, i32
  }
  func.func @transform_1(%arg0: i32, %arg1: i32) -> (i32, i32, i32) {
    %c0_i32 = arith.constant 0 : i32
    %c0_i32_0 = arith.constant 0 : i32
    return %arg0, %c0_i32, %arg1 : i32, i32, i32
  }
  func.func @transform_2(%arg0: i32, %arg1: i32) -> i32 {
    %c0_i32 = arith.constant 0 : i32
    %c0_i32_0 = arith.constant 0 : i32
    return %c0_i32 : i32
  }
  func.func @transform_3(%arg0: i32, %arg1: i32) -> i32 {
    %c0_i32 = arith.constant 0 : i32
    %c0_i32_0 = arith.constant 0 : i32
    return %c0_i32 : i32
  }
  func.func @transform_4(%arg0: i32, %arg1: i32) -> (i32, i32) {
    %c0_i32 = arith.constant 0 : i32
    %c0_i32_0 = arith.constant 0 : i32
    %c0_i32_1 = arith.constant 0 : i32
    return %c0_i32, %c0_i32_0 : i32, i32
  }
  func.func @transform_5(%arg0: i32, %arg1: i32) -> i32 {
    %c0_i32 = arith.constant 0 : i32
    %c0_i32_0 = arith.constant 0 : i32
    return %c0_i32 : i32
  }
  func.func @transform_6(%arg0: i32, %arg1: i32) -> i32 {
    %c0_i32 = arith.constant 0 : i32
    %c0_i32_0 = arith.constant 0 : i32
    return %c0_i32 : i32
  }
  func.func @transform_7(%arg0: i32, %arg1: i32) -> i32 {
    %c0_i32 = arith.constant 0 : i32
    %c0_i32_0 = arith.constant 0 : i32
    return %c0_i32 : i32
  }
  func.func @transform_8(%arg0: i32, %arg1: i32) -> i32 {
    %c0_i32 = arith.constant 0 : i32
    %c0_i32_0 = arith.constant 0 : i32
    return %c0_i32 : i32
  }
  func.func @transform_9(%arg0: i32, %arg1: i32) -> i32 {
    %c0_i32 = arith.constant 0 : i32
    %c0_i32_0 = arith.constant 0 : i32
    return %c0_i32 : i32
  }
  func.func @transform_10(%arg0: i32, %arg1: i32) -> (i32, i32) {
    %c0_i32 = arith.constant 0 : i32
    %c0_i32_0 = arith.constant 0 : i32
    %c0_i32_1 = arith.constant 0 : i32
    return %c0_i32, %c0_i32_0 : i32, i32
  }
  func.func @transform_11(%arg0: i32, %arg1: i32) -> i32 {
    %c0_i32 = arith.constant 0 : i32
    %c0_i32_0 = arith.constant 0 : i32
    return %c0_i32 : i32
  }
  func.func @transform_12(%arg0: i32, %arg1: i32) -> (i32, i32, i32) {
    %c0_i32 = arith.constant 0 : i32
    %c0_i32_0 = arith.constant 0 : i32
    return %arg0, %c0_i32, %arg1 : i32, i32, i32
  }
}

</mosaic_0001>

<llo_original>
// kernel: tpu_custom_call.1
$region0: #{tpu_custom_call.1}
  #allocation0 [shape = 'u32[]', space=smem, size = 0x4, offset = 0x4, fixed_abs, tag = 'smem constant byte address 0x4 - core index']
  #allocation1 [shape = 'u32[144,128]{1,0:T(1,128)}', space=vmem, size = 0x12000, scoped, tag = 'internal scratch']
  #allocation2 [shape = 'f32[1]{0:T(128)S(6)}', space=smem, size = 0x200, scoped, tag = 'scoped memory for tpu_custom_call.1']
  %s0 = inlined_call_operand.hbm [shape: f32[2,4,256], index: 0, kind: input, shape index: {}]
  %s1 = inlined_call_operand.hbm [shape: f32[2,4,256], index: 1, kind: input, shape index: {}]
  %s2 = inlined_call_operand.vmem [shape: f32[4], index: 2, kind: input, shape index: {}]
  %s3 = inlined_call_operand.vmem [shape: f32[4], index: 3, kind: input, shape index: {}]
  %s4 = inlined_call_operand.vmem [shape: f32[4,4], index: 4, kind: input, shape index: {}]
  %s5 = inlined_call_operand.vmem [shape: f32[4], index: 5, kind: input, shape index: {}]
  %s6 = inlined_call_operand.vmem [shape: f32[4], index: 6, kind: input, shape index: {}]
  %s7 = inlined_call_operand.vmem [shape: f32[4], index: 7, kind: input, shape index: {}]
  %s8 = inlined_call_operand.vmem [shape: f32[4], index: 8, kind: input, shape index: {}]
  %s9 = inlined_call_operand.<no memory space> [shape: f32[1], index: 9, kind: input, shape index: {}]
  %s10 = inlined_call_operand.vmem [shape: f32[4,4], index: 10, kind: input, shape index: {}]
  %s11 = inlined_call_operand.vmem [shape: f32[4], index: 11, kind: input, shape index: {}]
  %s12 = inlined_call_operand.hbm [shape: f32[2,4,256], index: 12, kind: output, shape index: {}]
  %s13 = sld [smem:[#allocation0]]
  $region125: #{tpu_custom_call.1} parent=0
    _
  %s15 = ssub.s32 1, %s13
  %s16 = scalar_select 0, %s15, %s13
  %17 = sst [smem:[#allocation2]] %s9
  $region1: #{tpu_custom_call.1} parent=0
    #allocation3 [shape = 'u8[8192]{0}', space=vmem, size = 0x2000, scoped, tag = 'input window, operand 0']
    #allocation4 [shape = 's32[2]{0}', space=sflag, size = 0x8, scoped, tag = 'scoped memory for tpu_custom_call.1']
    #allocation5 [shape = 's32[2]{0}', space=sflag, size = 0x8, scoped, tag = 'scoped memory for tpu_custom_call.1']
    #allocation6 [shape = 's32[2]{0}', space=sflag, size = 0x8, scoped, tag = 'scoped memory for tpu_custom_call.1']
    #allocation7 [shape = 'u8[8192]{0}', space=vmem, size = 0x2000, scoped, tag = 'input window, operand 1']
    #allocation8 [shape = 's32[2]{0}', space=sflag, size = 0x8, scoped, tag = 'scoped memory for tpu_custom_call.1']
    #allocation9 [shape = 'u8[512]{0}', space=smem, size = 0x200, scoped, tag = 'input window, operand 2, single buffered']
    #allocation10 [shape = 'u8[512]{0}', space=smem, size = 0x200, scoped, tag = 'input window, operand 3, single buffered']
    #allocation11 [shape = 's32[1]{0}', space=sflag, size = 0x4, scoped, tag = 'scoped memory for tpu_custom_call.1']
    #allocation12 [shape = 'u8[2048]{0}', space=smem, size = 0x800, scoped, tag = 'input window, operand 4, single buffered']
    #allocation13 [shape = 'u8[512]{0}', space=smem, size = 0x200, scoped, tag = 'input window, operand 5, single buffered']
    #allocation14 [shape = 's32[1]{0}', space=sflag, size = 0x4, scoped, tag = 'scoped memory for tpu_custom_call.1']
    #allocation15 [shape = 'u8[512]{0}', space=smem, size = 0x200, scoped, tag = 'input window, operand 6, single buffered']
    #allocation16 [shape = 'u8[512]{0}', space=smem, size = 0x200, scoped, tag = 'input window, operand 7, single buffered']
    #allocation17 [shape = 's32[1]{0}', space=sflag, size = 0x4, scoped, tag = 'scoped memory for tpu_custom_call.1']
    #allocation18 [shape = 'u8[512]{0}', space=smem, size = 0x200, scoped, tag = 'input window, operand 8, single buffered']
    #allocation19 [shape = 'u8[2048]{0}', space=smem, size = 0x800, scoped, tag = 'input window, operand 10, single buffered']
    #allocation20 [shape = 's32[1]{0}', space=sflag, size = 0x4, scoped, tag = 'scoped memory for tpu_custom_call.1']
    #allocation21 [shape = 'u8[512]{0}', space=smem, size = 0x200, scoped, tag = 'input window, operand 11, single buffered']
    #allocation22 [shape = 'u8[8192]{0}', space=vmem, size = 0x2000, scoped, tag = 'output window, operand 0']
    %18 = vsyncpa [#allocation4], 0
    %s19 = scalar_lea.sflag [#allocation4], 1
    %20 = vsyncpa %s19, 0
    %21 = vsyncpa [#allocation8], 0
    %s22 = scalar_lea.sflag [#allocation8], 1
    %23 = vsyncpa %s22, 0
    %24 = vsyncpa [#allocation6], 0
    %25 = vsyncpa [#allocation11], 0
    %26 = vsyncpa [#allocation14], 0
    %27 = vsyncpa [#allocation17], 0
    %28 = vsyncpa [#allocation20], 0
    %29 = vsyncpa [#allocation5], 0
    %s30 = scalar_lea.sflag [#allocation5], 1
    %31 = vsyncpa %s30, 0
    loop: start=0, step=1, limit=4
    $region2: #{tpu_custom_call.1} parent=1 // loop_pre_header
      _
    $region3: #{tpu_custom_call.1} parent=1 // loop_header
      %s33 = sphi 0, %s37
      %p34 = scmp.ge.s32.totalorder %s33, 4
      %s40 = sphi 0, %s52
      %s41 = sphi 0, %s48
      %s42 = sphi 0, %s40
      %s43 = sphi 0, %s41
      %s44 = sphi 0, %s42
      %s45 = sphi 0, %s43
      %s57 = sphi 0, %s59
      %s60 = sphi 0, %s57
      %s61 = sphi 0, %s60
      %s77 = sphi 0, %s61
      %s85 = sphi 0, %s87
      %s88 = sphi 0, %s85
      %s89 = sphi 0, %s88
      %s105 = sphi 0, %s89
      %s109 = sphi 0, %s109
      %s111 = sphi 0, %s109
      %s112 = sphi 0, %s111
      %s126 = sphi 0, %s112
      %s130 = sphi 0, %s130
      %s132 = sphi 0, %s130
      %s133 = sphi 0, %s132
      %s147 = sphi 0, %s133
      %s151 = sphi 0, %s151
      %s153 = sphi 0, %s151
      %s154 = sphi 0, %s153
      %s168 = sphi 0, %s154
      %s172 = sphi 0, %s172
      %s174 = sphi 0, %s172
      %s175 = sphi 0, %s174
      %s189 = sphi 0, %s175
      %s193 = sphi 0, %s193
      %s195 = sphi 0, %s193
      %s196 = sphi 0, %s195
      %s210 = sphi 0, %s196
      %s214 = sphi 0, %s214
      %s216 = sphi 0, %s214
      %s217 = sphi 0, %s216
      %s231 = sphi 0, %s217
      %s235 = sphi 0, %s235
      %s237 = sphi 0, %s235
      %s238 = sphi 0, %s237
      %s252 = sphi 0, %s238
      %s256 = sphi 0, %s256
      %s258 = sphi 0, %s256
      %s259 = sphi 0, %s258
      %s273 = sphi 0, %s259
      %s277 = sphi 0, %s277
      %s279 = sphi 0, %s277
      %s280 = sphi 0, %s279
      %s294 = sphi 0, %s280
      %s298 = sphi 0, %s298
      %s300 = sphi 0, %s298
      %s301 = sphi 0, %s300
      %s315 = sphi 0, %s301
      %s323 = sphi 0, %s325
      %s326 = sphi 0, %s323
      %s327 = sphi 0, %s326
      %s343 = sphi 0, %s327
    $region4: #{tpu_custom_call.1} parent=1 // loop_header_branch
      %36 = sbr.rel (%p34) target = $region8
    $region5: #{tpu_custom_call.1} parent=1 // loop_body
      %s38 = ssub.s32 %s33, 1
      %s39 = ssub.s32 %s33, 2
      %s46 = sadd.s32 1, %s41
      %p47 = scmp.ge.s32.totalorder %s46, 1
      %s48 = scalar_select %p47, 0, %s46
      %s49 = sadd.s32 1, %s40
      %s50 = scalar_select %p47, %s49, %s40
      %p51 = scmp.ge.s32.totalorder %s50, 2
      %s52 = scalar_select %p51, 0, %s50
      %s53 = ssub.s32 %s40, %s52
      %s54 = ssub.s32 %s41, %s48
      %s55 = sor.u32 %s53, %s54
      %p56 = scmp.eq.s32.totalorder %s55, 0
      %s58 = sadd.s32 %s57, 1
      %s59 = scalar_select %p56, %s57, %s58
      %p62 = pneg %p56
      %p63 = scmp.eq.s32.totalorder %s33, 1
      %p64 = por %p62, %p63
      %p65 = scmp.ne.s32.totalorder %s57, %s60
      %p66 = scmp.eq.s32.totalorder %s33, 0
      %p67 = por %p65, %p66
      %p68 = scmp.ne.s32.totalorder %s57, %s60
      %p69 = scmp.eq.s32.totalorder %s38, 1
      %p70 = por %p68, %p69
      %p71 = scmp.ne.s32.totalorder %s60, %s61
      %p72 = scmp.eq.s32.totalorder %s38, 0
      %p73 = por %p71, %p72
      %p74 = scmp.ne.s32.totalorder %s60, %s61
      %p75 = scmp.eq.s32.totalorder %s39, 1
      %p76 = por %p74, %p75
      %p78 = scmp.ne.s32.totalorder %s61, %s77
      %p79 = scmp.eq.s32.totalorder %s39, 0
      %p80 = por %p78, %p79
      %s81 = ssub.s32 %s40, %s52
      %s82 = ssub.s32 %s41, %s48
      %s83 = sor.u32 %s81, %s82
      %p84 = scmp.eq.s32.totalorder %s83, 0
      %s86 = sadd.s32 %s85, 1
      %s87 = scalar_select %p84, %s85, %s86
      %p90 = pneg %p84
      %p91 = scmp.eq.s32.totalorder %s33, 1
      %p92 = por %p90, %p91
      %p93 = scmp.ne.s32.totalorder %s85, %s88
      %p94 = scmp.eq.s32.totalorder %s33, 0
      %p95 = por %p93, %p94
      %p96 = scmp.ne.s32.totalorder %s85, %s88
      %p97 = scmp.eq.s32.totalorder %s38, 1
      %p98 = por %p96, %p97
      %p99 = scmp.ne.s32.totalorder %s88, %s89
      %p100 = scmp.eq.s32.totalorder %s38, 0
      %p101 = por %p99, %p100
      %p102 = scmp.ne.s32.totalorder %s88, %s89
      %p103 = scmp.eq.s32.totalorder %s39, 1
      %p104 = por %p102, %p103
      %p106 = scmp.ne.s32.totalorder %s89, %s105
      %p107 = scmp.eq.s32.totalorder %s39, 0
      %p108 = por %p106, %p107
      %s110 = sadd.s32 %s109, 1
      %p113 = scmp.eq.s32.totalorder %s33, 1
      %p114 = scmp.ne.s32.totalorder %s109, %s111
      %p115 = scmp.eq.s32.totalorder %s33, 0
      %p116 = por %p114, %p115
      %p117 = scmp.ne.s32.totalorder %s109, %s111
      %p118 = scmp.eq.s32.totalorder %s38, 1
      %p119 = por %p117, %p118
      %p120 = scmp.ne.s32.totalorder %s111, %s112
      %p121 = scmp.eq.s32.totalorder %s38, 0
      %p122 = por %p120, %p121
      %p123 = scmp.ne.s32.totalorder %s111, %s112
      %p124 = scmp.eq.s32.totalorder %s39, 1
      %p125 = por %p123, %p124
      %p127 = scmp.ne.s32.totalorder %s112, %s126
      %p128 = scmp.eq.s32.totalorder %s39, 0
      %p129 = por %p127, %p128
      %s131 = sadd.s32 %s130, 1
      %p134 = scmp.eq.s32.totalorder %s33, 1
      %p135 = scmp.ne.s32.totalorder %s130, %s132
      %p136 = scmp.eq.s32.totalorder %s33, 0
      %p137 = por %p135, %p136
      %p138 = scmp.ne.s32.totalorder %s130, %s132
      %p139 = scmp.eq.s32.totalorder %s38, 1
      %p140 = por %p138, %p139
      %p141 = scmp.ne.s32.totalorder %s132, %s133
      %p142 = scmp.eq.s32.totalorder %s38, 0
      %p143 = por %p141, %p142
      %p144 = scmp.ne.s32.totalorder %s132, %s133
      %p145 = scmp.eq.s32.totalorder %s39, 1
      %p146 = por %p144, %p145
      %p148 = scmp.ne.s32.totalorder %s133, %s147
      %p149 = scmp.eq.s32.totalorder %s39, 0
      %p150 = por %p148, %p149
      %s152 = sadd.s32 %s151, 1
      %p155 = scmp.eq.s32.totalorder %s33, 1
      %p156 = scmp.ne.s32.totalorder %s151, %s153
      %p157 = scmp.eq.s32.totalorder %s33, 0
      %p158 = por %p156, %p157
      %p159 = scmp.ne.s32.totalorder %s151, %s153
      %p160 = scmp.eq.s32.totalorder %s38, 1
      %p161 = por %p159, %p160
      %p162 = scmp.ne.s32.totalorder %s153, %s154
      %p163 = scmp.eq.s32.totalorder %s38, 0
      %p164 = por %p162, %p163
      %p165 = scmp.ne.s32.totalorder %s153, %s154
      %p166 = scmp.eq.s32.totalorder %s39, 1
      %p167 = por %p165, %p166
      %p169 = scmp.ne.s32.totalorder %s154, %s168
      %p170 = scmp.eq.s32.totalorder %s39, 0
      %p171 = por %p169, %p170
      %s173 = sadd.s32 %s172, 1
      %p176 = scmp.eq.s32.totalorder %s33, 1
      %p177 = scmp.ne.s32.totalorder %s172, %s174
      %p178 = scmp.eq.s32.totalorder %s33, 0
      %p179 = por %p177, %p178
      %p180 = scmp.ne.s32.totalorder %s172, %s174
      %p181 = scmp.eq.s32.totalorder %s38, 1
      %p182 = por %p180, %p181
      %p183 = scmp.ne.s32.totalorder %s174, %s175
      %p184 = scmp.eq.s32.totalorder %s38, 0
      %p185 = por %p183, %p184
      %p186 = scmp.ne.s32.totalorder %s174, %s175
      %p187 = scmp.eq.s32.totalorder %s39, 1
      %p188 = por %p186, %p187
      %p190 = scmp.ne.s32.totalorder %s175, %s189
      %p191 = scmp.eq.s32.totalorder %s39, 0
      %p192 = por %p190, %p191
      %s194 = sadd.s32 %s193, 1
      %p197 = scmp.eq.s32.totalorder %s33, 1
      %p198 = scmp.ne.s32.totalorder %s193, %s195
      %p199 = scmp.eq.s32.totalorder %s33, 0
      %p200 = por %p198, %p199
      %p201 = scmp.ne.s32.totalorder %s193, %s195
      %p202 = scmp.eq.s32.totalorder %s38, 1
      %p203 = por %p201, %p202
      %p204 = scmp.ne.s32.totalorder %s195, %s196
      %p205 = scmp.eq.s32.totalorder %s38, 0
      %p206 = por %p204, %p205
      %p207 = scmp.ne.s32.totalorder %s195, %s196
      %p208 = scmp.eq.s32.totalorder %s39, 1
      %p209 = por %p207, %p208
      %p211 = scmp.ne.s32.totalorder %s196, %s210
      %p212 = scmp.eq.s32.totalorder %s39, 0
      %p213 = por %p211, %p212
      %s215 = sadd.s32 %s214, 1
      %p218 = scmp.eq.s32.totalorder %s33, 1
      %p219 = scmp.ne.s32.totalorder %s214, %s216
      %p220 = scmp.eq.s32.totalorder %s33, 0
      %p221 = por %p219, %p220
      %p222 = scmp.ne.s32.totalorder %s214, %s216
      %p223 = scmp.eq.s32.totalorder %s38, 1
      %p224 = por %p222, %p223
      %p225 = scmp.ne.s32.totalorder %s216, %s217
      %p226 = scmp.eq.s32.totalorder %s38, 0
      %p227 = por %p225, %p226
      %p228 = scmp.ne.s32.totalorder %s216, %s217
      %p229 = scmp.eq.s32.totalorder %s39, 1
      %p230 = por %p228, %p229
      %p232 = scmp.ne.s32.totalorder %s217, %s231
      %p233 = scmp.eq.s32.totalorder %s39, 0
      %p234 = por %p232, %p233
      %s236 = sadd.s32 %s235, 1
      %p239 = scmp.eq.s32.totalorder %s33, 1
      %p240 = scmp.ne.s32.totalorder %s235, %s237
      %p241 = scmp.eq.s32.totalorder %s33, 0
      %p242 = por %p240, %p241
      %p243 = scmp.ne.s32.totalorder %s235, %s237
      %p244 = scmp.eq.s32.totalorder %s38, 1
      %p245 = por %p243, %p244
      %p246 = scmp.ne.s32.totalorder %s237, %s238
      %p247 = scmp.eq.s32.totalorder %s38, 0
      %p248 = por %p246, %p247
      %p249 = scmp.ne.s32.totalorder %s237, %s238
      %p250 = scmp.eq.s32.totalorder %s39, 1
      %p251 = por %p249, %p250
      %p253 = scmp.ne.s32.totalorder %s238, %s252
      %p254 = scmp.eq.s32.totalorder %s39, 0
      %p255 = por %p253, %p254
      %s257 = sadd.s32 %s256, 1
      %p260 = scmp.eq.s32.totalorder %s33, 1
      %p261 = scmp.ne.s32.totalorder %s256, %s258
      %p262 = scmp.eq.s32.totalorder %s33, 0
      %p263 = por %p261, %p262
      %p264 = scmp.ne.s32.totalorder %s256, %s258
      %p265 = scmp.eq.s32.totalorder %s38, 1
      %p266 = por %p264, %p265
      %p267 = scmp.ne.s32.totalorder %s258, %s259
      %p268 = scmp.eq.s32.totalorder %s38, 0
      %p269 = por %p267, %p268
      %p270 = scmp.ne.s32.totalorder %s258, %s259
      %p271 = scmp.eq.s32.totalorder %s39, 1
      %p272 = por %p270, %p271
      %p274 = scmp.ne.s32.totalorder %s259, %s273
      %p275 = scmp.eq.s32.totalorder %s39, 0
      %p276 = por %p274, %p275
      %s278 = sadd.s32 %s277, 1
      %p281 = scmp.eq.s32.totalorder %s33, 1
      %p282 = scmp.ne.s32.totalorder %s277, %s279
      %p283 = scmp.eq.s32.totalorder %s33, 0
      %p284 = por %p282, %p283
      %p285 = scmp.ne.s32.totalorder %s277, %s279
      %p286 = scmp.eq.s32.totalorder %s38, 1
      %p287 = por %p285, %p286
      %p288 = scmp.ne.s32.totalorder %s279, %s280
      %p289 = scmp.eq.s32.totalorder %s38, 0
      %p290 = por %p288, %p289
      %p291 = scmp.ne.s32.totalorder %s279, %s280
      %p292 = scmp.eq.s32.totalorder %s39, 1
      %p293 = por %p291, %p292
      %p295 = scmp.ne.s32.totalorder %s280, %s294
      %p296 = scmp.eq.s32.totalorder %s39, 0
      %p297 = por %p295, %p296
      %s299 = sadd.s32 %s298, 1
      %p302 = scmp.eq.s32.totalorder %s33, 1
      %p303 = scmp.ne.s32.totalorder %s298, %s300
      %p304 = scmp.eq.s32.totalorder %s33, 0
      %p305 = por %p303, %p304
      %p306 = scmp.ne.s32.totalorder %s298, %s300
      %p307 = scmp.eq.s32.totalorder %s38, 1
      %p308 = por %p306, %p307
      %p309 = scmp.ne.s32.totalorder %s300, %s301
      %p310 = scmp.eq.s32.totalorder %s38, 0
      %p311 = por %p309, %p310
      %p312 = scmp.ne.s32.totalorder %s300, %s301
      %p313 = scmp.eq.s32.totalorder %s39, 1
      %p314 = por %p312, %p313
      %p316 = scmp.ne.s32.totalorder %s301, %s315
      %p317 = scmp.eq.s32.totalorder %s39, 0
      %p318 = por %p316, %p317
      %s319 = ssub.s32 %s40, %s52
      %s320 = ssub.s32 %s41, %s48
      %s321 = sor.u32 %s319, %s320
      %p322 = scmp.eq.s32.totalorder %s321, 0
      %s324 = sadd.s32 %s323, 1
      %s325 = scalar_select %p322, %s323, %s324
      %p328 = pneg %p322
      %p329 = scmp.eq.s32.totalorder %s33, 1
      %p330 = por %p328, %p329
      %p331 = scmp.ne.s32.totalorder %s323, %s326
      %p332 = scmp.eq.s32.totalorder %s33, 0
      %p333 = por %p331, %p332
      %p334 = scmp.ne.s32.totalorder %s323, %s326
      %p335 = scmp.eq.s32.totalorder %s38, 1
      %p336 = por %p334, %p335
      %p337 = scmp.ne.s32.totalorder %s326, %s327
      %p338 = scmp.eq.s32.totalorder %s38, 0
      %p339 = por %p337, %p338
      %p340 = scmp.ne.s32.totalorder %s326, %s327
      %p341 = scmp.eq.s32.totalorder %s39, 1
      %p342 = por %p340, %p341
      %p344 = scmp.ne.s32.totalorder %s327, %s343
      %p345 = scmp.eq.s32.totalorder %s39, 0
      %p346 = por %p344, %p345
      %p347 = scmp.le.s32.totalorder 1, %s33
      %p348 = scmp.lt.s32.totalorder %s33, 3
      %p349 = pnand %p347, %p348
      %p350 = pneg %p349
      // Predicated region
      $region9: #{tpu_custom_call.1} parent=5 // pred_check
        _
      $region10: #{tpu_custom_call.1} parent=5 // pred_check_branch
        %352 = sbr.rel (%p349) target = $region12
      $region11: #{tpu_custom_call.1} parent=5 // pred_region
        %s353 = ssub.s32 %s33, 1
        // Predicated region
        $region13: #{tpu_custom_call.1} parent=11 // pred_check
          %p354 = pneg %p122
        $region14: #{tpu_custom_call.1} parent=11 // pred_check_branch
          %356 = sbr.rel (%p354) target = $region16
        $region15: #{tpu_custom_call.1} parent=11 // pred_region
          %s358 = ssub.s32 16, 16
          %359 = vsyncadd [#allocation6], %s358
          %s361 = sshll.u32 %s2, 4
          %s362 = int_to_ptr.vmem [resolvable:$true] %s361
          %364 = dma.vmem_to_smem %s362, 16, [#allocation9], [#allocation6]
        $region16: #{tpu_custom_call.1} parent=11 // pred_fallthru
          _
        // Predicated region
        $region17: #{tpu_custom_call.1} parent=11 // pred_check
          %p365 = pneg %p143
        $region18: #{tpu_custom_call.1} parent=11 // pred_check_branch
          %367 = sbr.rel (%p365) target = $region20
        $region19: #{tpu_custom_call.1} parent=11 // pred_region
          %s369 = ssub.s32 16, 16
          %370 = vsyncadd [#allocation11], %s369
          %s372 = sshll.u32 %s3, 4
          %s373 = int_to_ptr.vmem [resolvable:$true] %s372
          %375 = dma.vmem_to_smem %s373, 16, [#allocation10], [#allocation11]
        $region20: #{tpu_custom_call.1} parent=11 // pred_fallthru
          _
        // Predicated region
        $region21: #{tpu_custom_call.1} parent=11 // pred_check
          %p376 = pneg %p164
        $region22: #{tpu_custom_call.1} parent=11 // pred_check_branch
          %378 = sbr.rel (%p376) target = $region24
        $region23: #{tpu_custom_call.1} parent=11 // pred_region
          %s380 = ssub.s32 64, 64
          %381 = vsyncadd [#allocation11], %s380
          %s383 = sshll.u32 %s4, 4
          %s384 = int_to_ptr.vmem [resolvable:$true] %s383
          %386 = dma.vmem_to_smem %s384, 64, [#allocation12], [#allocation11]
        $region24: #{tpu_custom_call.1} parent=11 // pred_fallthru
          _
        // Predicated region
        $region25: #{tpu_custom_call.1} parent=11 // pred_check
          %p387 = pneg %p185
        $region26: #{tpu_custom_call.1} parent=11 // pred_check_branch
          %389 = sbr.rel (%p387) target = $region28
        $region27: #{tpu_custom_call.1} parent=11 // pred_region
          %s391 = ssub.s32 16, 16
          %392 = vsyncadd [#allocation14], %s391
          %s394 = sshll.u32 %s5, 4
          %s395 = int_to_ptr.vmem [resolvable:$true] %s394
          %397 = dma.vmem_to_smem %s395, 16, [#allocation13], [#allocation14]
        $region28: #{tpu_custom_call.1} parent=11 // pred_fallthru
          _
        // Predicated region
        $region29: #{tpu_custom_call.1} parent=11 // pred_check
          %p398 = pneg %p206
        $region30: #{tpu_custom_call.1} parent=11 // pred_check_branch
          %400 = sbr.rel (%p398) target = $region32
        $region31: #{tpu_custom_call.1} parent=11 // pred_region
          %s402 = ssub.s32 16, 16
          %403 = vsyncadd [#allocation14], %s402
          %s405 = sshll.u32 %s6, 4
          %s406 = int_to_ptr.vmem [resolvable:$true] %s405
          %408 = dma.vmem_to_smem %s406, 16, [#allocation15], [#allocation14]
        $region32: #{tpu_custom_call.1} parent=11 // pred_fallthru
          _
        // Predicated region
        $region33: #{tpu_custom_call.1} parent=11 // pred_check
          %p409 = pneg %p227
        $region34: #{tpu_custom_call.1} parent=11 // pred_check_branch
          %411 = sbr.rel (%p409) target = $region36
        $region35: #{tpu_custom_call.1} parent=11 // pred_region
          %s413 = ssub.s32 16, 16
          %414 = vsyncadd [#allocation17], %s413
          %s416 = sshll.u32 %s7, 4
          %s417 = int_to_ptr.vmem [resolvable:$true] %s416
          %419 = dma.vmem_to_smem %s417, 16, [#allocation16], [#allocation17]
        $region36: #{tpu_custom_call.1} parent=11 // pred_fallthru
          _
        // Predicated region
        $region37: #{tpu_custom_call.1} parent=11 // pred_check
          %p420 = pneg %p248
        $region38: #{tpu_custom_call.1} parent=11 // pred_check_branch
          %422 = sbr.rel (%p420) target = $region40
        $region39: #{tpu_custom_call.1} parent=11 // pred_region
          %s424 = ssub.s32 16, 16
          %425 = vsyncadd [#allocation17], %s424
          %s427 = sshll.u32 %s8, 4
          %s428 = int_to_ptr.vmem [resolvable:$true] %s427
          %430 = dma.vmem_to_smem %s428, 16, [#allocation18], [#allocation17]
        $region40: #{tpu_custom_call.1} parent=11 // pred_fallthru
          _
        // Predicated region
        $region41: #{tpu_custom_call.1} parent=11 // pred_check
          %p431 = pneg %p269
        $region42: #{tpu_custom_call.1} parent=11 // pred_check_branch
          %433 = sbr.rel (%p431) target = $region44
        $region43: #{tpu_custom_call.1} parent=11 // pred_region
          _
        $region44: #{tpu_custom_call.1} parent=11 // pred_fallthru
          _
        // Predicated region
        $region45: #{tpu_custom_call.1} parent=11 // pred_check
          %p434 = pneg %p290
        $region46: #{tpu_custom_call.1} parent=11 // pred_check_branch
          %436 = sbr.rel (%p434) target = $region48
        $region47: #{tpu_custom_call.1} parent=11 // pred_region
          %s438 = ssub.s32 64, 64
          %439 = vsyncadd [#allocation20], %s438
          %s441 = sshll.u32 %s10, 4
          %s442 = int_to_ptr.vmem [resolvable:$true] %s441
          %444 = dma.vmem_to_smem %s442, 64, [#allocation19], [#allocation20]
        $region48: #{tpu_custom_call.1} parent=11 // pred_fallthru
          _
        // Predicated region
        $region49: #{tpu_custom_call.1} parent=11 // pred_check
          %p445 = pneg %p311
        $region50: #{tpu_custom_call.1} parent=11 // pred_check_branch
          %447 = sbr.rel (%p445) target = $region52
        $region51: #{tpu_custom_call.1} parent=11 // pred_region
          %s449 = ssub.s32 16, 16
          %450 = vsyncadd [#allocation20], %s449
          %s452 = sshll.u32 %s11, 4
          %s453 = int_to_ptr.vmem [resolvable:$true] %s452
          %455 = dma.vmem_to_smem %s453, 16, [#allocation21], [#allocation20]
        $region52: #{tpu_custom_call.1} parent=11 // pred_fallthru
          _
      $region12: #{tpu_custom_call.1} parent=5 // pred_fallthru
        _
      %p456 = scmp.lt.s32.totalorder %s33, 2
      // Predicated region
      $region53: #{tpu_custom_call.1} parent=5 // pred_check
        %p457 = pneg %p456
      $region54: #{tpu_custom_call.1} parent=5 // pred_check_branch
        %459 = sbr.rel (%p457) target = $region56
      $region55: #{tpu_custom_call.1} parent=5 // pred_region
        // Predicated region
        $region57: #{tpu_custom_call.1} parent=55 // pred_check
          %p460 = pneg %p67
        $region58: #{tpu_custom_call.1} parent=55 // pred_check_branch
          %462 = sbr.rel (%p460) target = $region60
        $region59: #{tpu_custom_call.1} parent=55 // pred_region
          %s463 = sand.u32 %s57, 1
          %s464 = scalar_lea.sflag [#allocation4], %s463
          %s465 = sand.u32 %s57, 1
          %s466 = smul.addr %s465, 8
          %s467 = scalar_lea.vmem [#allocation3], %s466
          %s468 = smul.u32 2, %s41
          %s470 = ssub.s32 128, 128
          %471 = vsyncadd %s464, %s470
          %s472 = smul.addr %s40, 2
          %s473 = sadd.s32 %s468, %s472
          %s474 = smul.addr %s473, 64
          %s475 = scalar_lea.hbm %s0, %s474
          %s477 = sshll.u32 %s467, 4
          %s478 = int_to_ptr.vmem [resolvable:$true] %s477
          %480 = dma.hbm_to_vmem [thread:$0]  %s475, 128, %s478, %s464
        $region60: #{tpu_custom_call.1} parent=55 // pred_fallthru
          _
        // Predicated region
        $region61: #{tpu_custom_call.1} parent=55 // pred_check
          %p481 = pneg %p95
        $region62: #{tpu_custom_call.1} parent=55 // pred_check_branch
          %483 = sbr.rel (%p481) target = $region64
        $region63: #{tpu_custom_call.1} parent=55 // pred_region
          %s484 = sand.u32 %s85, 1
          %s485 = scalar_lea.sflag [#allocation8], %s484
          %s486 = sand.u32 %s85, 1
          %s487 = smul.addr %s486, 8
          %s488 = scalar_lea.vmem [#allocation7], %s487
          %s489 = smul.u32 2, %s41
          %s491 = ssub.s32 128, 128
          %492 = vsyncadd %s485, %s491
          %s493 = smul.addr %s40, 2
          %s494 = sadd.s32 %s489, %s493
          %s495 = smul.addr %s494, 64
          %s496 = scalar_lea.hbm %s1, %s495
          %s498 = sshll.u32 %s488, 4
          %s499 = int_to_ptr.vmem [resolvable:$true] %s498
          %501 = dma.hbm_to_vmem [thread:$0]  %s496, 128, %s499, %s485
        $region64: #{tpu_custom_call.1} parent=55 // pred_fallthru
          _
      $region56: #{tpu_custom_call.1} parent=5 // pred_fallthru
        _
      %p502 = scmp.le.s32.totalorder 1, %s33
      %p503 = scmp.lt.s32.totalorder %s33, 3
      %p504 = pnand %p502, %p503
      %p505 = pneg %p504
      // Predicated region
      $region65: #{tpu_custom_call.1} parent=5 // pred_check
        _
      $region66: #{tpu_custom_call.1} parent=5 // pred_check_branch
        %507 = sbr.rel (%p504) target = $region68
      $region67: #{tpu_custom_call.1} parent=5 // pred_region
        %s508 = ssub.s32 %s33, 1
        %s509 = sand.u32 %s60, 1
        %s510 = scalar_lea.sflag [#allocation4], %s509
        %s511 = sand.u32 %s60, 1
        %s512 = smul.addr %s511, 8
        %s513 = scalar_lea.vmem [#allocation3], %s512
        // Predicated region
        $region69: #{tpu_custom_call.1} parent=67 // pred_check
          %p514 = pneg %p73
        $region70: #{tpu_custom_call.1} parent=67 // pred_check_branch
          %516 = sbr.rel (%p514) target = $region72
        $region71: #{tpu_custom_call.1} parent=67 // pred_region
          %517 = dma.done %s510, 128
        $region72: #{tpu_custom_call.1} parent=67 // pred_fallthru
          _
        %s518 = sand.u32 %s88, 1
        %s519 = scalar_lea.sflag [#allocation8], %s518
        %s520 = sand.u32 %s88, 1
        %s521 = smul.addr %s520, 8
        %s522 = scalar_lea.vmem [#allocation7], %s521
        // Predicated region
        $region73: #{tpu_custom_call.1} parent=67 // pred_check
          %p523 = pneg %p101
        $region74: #{tpu_custom_call.1} parent=67 // pred_check_branch
          %525 = sbr.rel (%p523) target = $region76
        $region75: #{tpu_custom_call.1} parent=67 // pred_region
          %526 = dma.done %s519, 128
        $region76: #{tpu_custom_call.1} parent=67 // pred_fallthru
          _
        // Predicated region
        $region77: #{tpu_custom_call.1} parent=67 // pred_check
          %p527 = pneg %p122
        $region78: #{tpu_custom_call.1} parent=67 // pred_check_branch
          %529 = sbr.rel (%p527) target = $region80
        $region79: #{tpu_custom_call.1} parent=67 // pred_region
          %530 = dma.done [#allocation6], 16
        $region80: #{tpu_custom_call.1} parent=67 // pred_fallthru
          _
        // Predicated region
        $region81: #{tpu_custom_call.1} parent=67 // pred_check
          %p531 = pneg %p143
        $region82: #{tpu_custom_call.1} parent=67 // pred_check_branch
          %533 = sbr.rel (%p531) target = $region84
        $region83: #{tpu_custom_call.1} parent=67 // pred_region
          %534 = dma.done [#allocation11], 16
        $region84: #{tpu_custom_call.1} parent=67 // pred_fallthru
          _
        // Predicated region
        $region85: #{tpu_custom_call.1} parent=67 // pred_check
          %p535 = pneg %p164
        $region86: #{tpu_custom_call.1} parent=67 // pred_check_branch
          %537 = sbr.rel (%p535) target = $region88
        $region87: #{tpu_custom_call.1} parent=67 // pred_region
          %538 = dma.done [#allocation11], 64
        $region88: #{tpu_custom_call.1} parent=67 // pred_fallthru
          _
        // Predicated region
        $region89: #{tpu_custom_call.1} parent=67 // pred_check
          %p539 = pneg %p185
        $region90: #{tpu_custom_call.1} parent=67 // pred_check_branch
          %541 = sbr.rel (%p539) target = $region92
        $region91: #{tpu_custom_call.1} parent=67 // pred_region
          %542 = dma.done [#allocation14], 16
        $region92: #{tpu_custom_call.1} parent=67 // pred_fallthru
          _
        // Predicated region
        $region93: #{tpu_custom_call.1} parent=67 // pred_check
          %p543 = pneg %p206
        $region94: #{tpu_custom_call.1} parent=67 // pred_check_branch
          %545 = sbr.rel (%p543) target = $region96
        $region95: #{tpu_custom_call.1} parent=67 // pred_region
          %546 = dma.done [#allocation14], 16
        $region96: #{tpu_custom_call.1} parent=67 // pred_fallthru
          _
        // Predicated region
        $region97: #{tpu_custom_call.1} parent=67 // pred_check
          %p547 = pneg %p227
        $region98: #{tpu_custom_call.1} parent=67 // pred_check_branch
          %549 = sbr.rel (%p547) target = $region100
        $region99: #{tpu_custom_call.1} parent=67 // pred_region
          %550 = dma.done [#allocation17], 16
        $region100: #{tpu_custom_call.1} parent=67 // pred_fallthru
          _
        // Predicated region
        $region101: #{tpu_custom_call.1} parent=67 // pred_check
          %p551 = pneg %p248
        $region102: #{tpu_custom_call.1} parent=67 // pred_check_branch
          %553 = sbr.rel (%p551) target = $region104
        $region103: #{tpu_custom_call.1} parent=67 // pred_region
          %554 = dma.done [#allocation17], 16
        $region104: #{tpu_custom_call.1} parent=67 // pred_fallthru
          _
        // Predicated region
        $region105: #{tpu_custom_call.1} parent=67 // pred_check
          %p555 = pneg %p290
        $region106: #{tpu_custom_call.1} parent=67 // pred_check_branch
          %557 = sbr.rel (%p555) target = $region108
        $region107: #{tpu_custom_call.1} parent=67 // pred_region
          %558 = dma.done [#allocation20], 64
        $region108: #{tpu_custom_call.1} parent=67 // pred_fallthru
          _
        // Predicated region
        $region109: #{tpu_custom_call.1} parent=67 // pred_check
          %p559 = pneg %p311
        $region110: #{tpu_custom_call.1} parent=67 // pred_check_branch
          %561 = sbr.rel (%p559) target = $region112
        $region111: #{tpu_custom_call.1} parent=67 // pred_region
          %562 = dma.done [#allocation20], 16
        $region112: #{tpu_custom_call.1} parent=67 // pred_fallthru
          _
        %563 = sfence
        %s564 = sand.u32 %s60, 1
        %s565 = scalar_lea.sflag [#allocation4], %s564
        %s566 = sand.u32 %s60, 1
        %s567 = smul.addr %s566, 8
        %s568 = scalar_lea.vmem [#allocation3], %s567
        %p569 = pneg %p73
        %p570 = pneg %p70
        %s571 = sand.u32 %s88, 1
        %s572 = scalar_lea.sflag [#allocation8], %s571
        %s573 = sand.u32 %s88, 1
        %s574 = smul.addr %s573, 8
        %s575 = scalar_lea.vmem [#allocation7], %s574
        %p576 = pneg %p101
        %p577 = pneg %p98
        %p578 = pneg %p122
        %p579 = pneg %p119
        %p580 = pneg %p143
        %p581 = pneg %p140
        %p582 = pneg %p164
        %p583 = pneg %p161
        %p584 = pneg %p185
        %p585 = pneg %p182
        %p586 = pneg %p206
        %p587 = pneg %p203
        %p588 = pneg %p227
        %p589 = pneg %p224
        %p590 = pneg %p248
        %p591 = pneg %p245
        %p592 = pneg %p269
        %p593 = pneg %p266
        %p594 = pneg %p290
        %p595 = pneg %p287
        %p596 = pneg %p311
        %p597 = pneg %p308
        %p598 = pneg %p339
        %p599 = pneg %p336
        %s600 = sand.u32 %s326, 1
        %s601 = scalar_lea.sflag [#allocation5], %s600
        %s602 = sand.u32 %s326, 1
        %s603 = smul.addr %s602, 8
        %s604 = scalar_lea.vmem [#allocation22], %s603
        %s605 = smul.u32 2, %s43
        %s606 = smul.u32 2, %s43
        %s607 = smul.u32 2, %s43
        %v608 = vld [vmem:[%s513] sm:$0xff]
        %v610 = vrot.slane %v608, 5
        %v611 = vrot.slane %v610, 4
        %v613 = vadd.f32 %v608, %v611
        %v614 = vrot.slane %v608, 6
        %v615 = vrot.slane %v614, 4
        %v617 = vadd.f32 %v613, %v615
        %v618 = vrot.slane %v608, 7
        %v619 = vrot.slane %v618, 4
        %v621 = vadd.f32 %v617, %v619
        %v622 = vmul.f32 %v621, 0.25
        %v623 = vsub.f32 %v608, %v622
        %v625 = vrot.slane %v622, 7
        %v627 = vsub.f32 %v608, %v625
        %v628 = vrot.slane %v622, 6
        %v630 = vsub.f32 %v608, %v628
        %v631 = vrot.slane %v622, 5
        %v633 = vsub.f32 %v608, %v631
        %v634 = vmul.f32 %v623, %v623
        %v635 = vmul.f32 %v627, %v627
        %v637 = vrot.slane %v635, 5
        %v638 = vrot.slane %v637, 4
        %v640 = vadd.f32 %v634, %v638
        %v641 = vmul.f32 %v630, %v630
        %v643 = vrot.slane %v641, 6
        %v644 = vrot.slane %v643, 4
        %v646 = vadd.f32 %v640, %v644
        %v647 = vmul.f32 %v633, %v633
        %v649 = vrot.slane %v647, 7
        %v650 = vrot.slane %v649, 4
        %v652 = vadd.f32 %v646, %v650
        %v653 = vmul.f32 %v652, 0.25
        %v654 = vadd.f32 %v653, 1e-06
        %v655 = vrsqrt.pop %v654
        %v656 = vmul.f32 %v623, %v655
        %s657 = sld [smem:[#allocation9]]
        %v658 = vstv %s657
        %v659 = vmul.f32 %v656, %v658
        %s660 = sld [smem:[#allocation10]]
        %v661 = vstv %s660
        %v662 = vadd.f32 %v659, %v661
        %v664 = vrot.slane %v655, 7
        %v666 = vmul.f32 %v627, %v664
        %s667 = sld [smem:[#allocation9 + $0x1]]
        %v668 = vstv %s667
        %v669 = vmul.f32 %v666, %v668
        %s670 = sld [smem:[#allocation10 + $0x1]]
        %v671 = vstv %s670
        %v672 = vadd.f32 %v669, %v671
        %v673 = vrot.slane %v655, 6
        %v675 = vmul.f32 %v630, %v673
        %s676 = sld [smem:[#allocation9 + $0x2]]
        %v677 = vstv %s676
        %v678 = vmul.f32 %v675, %v677
        %s679 = sld [smem:[#allocation10 + $0x2]]
        %v680 = vstv %s679
        %v681 = vadd.f32 %v678, %v680
        %v682 = vrot.slane %v655, 5
        %v684 = vmul.f32 %v633, %v682
        %s685 = sld [smem:[#allocation9 + $0x3]]
        %v686 = vstv %s685
        %v687 = vmul.f32 %v684, %v686
        %s688 = sld [smem:[#allocation10 + $0x3]]
        %v689 = vstv %s688
        %v690 = vadd.f32 %v687, %v689
        %s691 = sld [smem:[#allocation12]]
        %v692 = vstv %s691
        %v693 = vmul.f32 %v662, %v692
        %s694 = sld [smem:[#allocation12 + $0x1]]
        %v695 = vstv %s694
        %v696 = vmul.f32 %v672, %v695
        %v698 = vrot.slane %v696, 5
        %v699 = vrot.slane %v698, 4
        %v701 = vadd.f32 %v693, %v699
        %s702 = sld [smem:[#allocation12 + $0x2]]
        %v703 = vstv %s702
        %v704 = vmul.f32 %v681, %v703
        %v706 = vrot.slane %v704, 6
        %v707 = vrot.slane %v706, 4
        %v709 = vadd.f32 %v701, %v707
        %s710 = sld [smem:[#allocation12 + $0x3]]
        %v711 = vstv %s710
        %v712 = vmul.f32 %v690, %v711
        %v714 = vrot.slane %v712, 7
        %v715 = vrot.slane %v714, 4
        %v717 = vadd.f32 %v709, %v715
        %s718 = sld [smem:[#allocation13]]
        %v719 = vstv %s718
        %v720 = vadd.f32 %v717, %v719
        %v721 = vmul.f32 %v720, 0.5
        %v722 = vmul.f32 %v720, 0.044715
        %v723 = vmul.f32 %v722, %v720
        %v724 = vmul.f32 %v723, %v720
        %v725 = vadd.f32 %v720, %v724
        %v726 = vmul.f32 %v725, 0.7978846
        %v727 = vtanh.pop %v726
        %v728 = vadd.f32 %v727, 1.0
        %v729 = vmul.f32 %v721, %v728
        %s730 = sld [smem:[#allocation12 + $0x80]]
        %v731 = vstv %s730
        %v732 = vmul.f32 %v662, %v731
        %s733 = sld [smem:[#allocation12 + $0x81]]
        %v734 = vstv %s733
        %v735 = vmul.f32 %v672, %v734
        %v737 = vrot.slane %v735, 5
        %v738 = vrot.slane %v737, 4
        %v740 = vadd.f32 %v732, %v738
        %s741 = sld [smem:[#allocation12 + $0x82]]
        %v742 = vstv %s741
        %v743 = vmul.f32 %v681, %v742
        %v745 = vrot.slane %v743, 6
        %v746 = vrot.slane %v745, 4
        %v748 = vadd.f32 %v740, %v746
        %s749 = sld [smem:[#allocation12 + $0x83]]
        %v750 = vstv %s749
        %v751 = vmul.f32 %v690, %v750
        %v753 = vrot.slane %v751, 7
        %v754 = vrot.slane %v753, 4
        %v756 = vadd.f32 %v748, %v754
        %s757 = sld [smem:[#allocation13 + $0x1]]
        %v758 = vstv %s757
        %v759 = vadd.f32 %v756, %v758
        %v760 = vmul.f32 %v759, 0.5
        %v761 = vmul.f32 %v759, 0.044715
        %v762 = vmul.f32 %v761, %v759
        %v763 = vmul.f32 %v762, %v759
        %v764 = vadd.f32 %v759, %v763
        %v765 = vmul.f32 %v764, 0.7978846
        %v766 = vtanh.pop %v765
        %v767 = vadd.f32 %v766, 1.0
        %v768 = vmul.f32 %v760, %v767
        %s769 = sld [smem:[#allocation12 + $0x100]]
        %v770 = vstv %s769
        %v771 = vmul.f32 %v662, %v770
        %s772 = sld [smem:[#allocation12 + $0x101]]
        %v773 = vstv %s772
        %v774 = vmul.f32 %v672, %v773
        %v776 = vrot.slane %v774, 5
        %v777 = vrot.slane %v776, 4
        %v779 = vadd.f32 %v771, %v777
        %s780 = sld [smem:[#allocation12 + $0x102]]
        %v781 = vstv %s780
        %v782 = vmul.f32 %v681, %v781
        %v784 = vrot.slane %v782, 6
        %v785 = vrot.slane %v784, 4
        %v787 = vadd.f32 %v779, %v785
        %s788 = sld [smem:[#allocation12 + $0x103]]
        %v789 = vstv %s788
        %v790 = vmul.f32 %v690, %v789
        %v792 = vrot.slane %v790, 7
        %v793 = vrot.slane %v792, 4
        %v795 = vadd.f32 %v787, %v793
        %s796 = sld [smem:[#allocation13 + $0x2]]
        %v797 = vstv %s796
        %v798 = vadd.f32 %v795, %v797
        %v799 = vmul.f32 %v798, 0.5
        %v800 = vmul.f32 %v798, 0.044715
        %v801 = vmul.f32 %v800, %v798
        %v802 = vmul.f32 %v801, %v798
        %v803 = vadd.f32 %v798, %v802
        %v804 = vmul.f32 %v803, 0.7978846
        %v805 = vtanh.pop %v804
        %v806 = vadd.f32 %v805, 1.0
        %v807 = vmul.f32 %v799, %v806
        %s808 = sld [smem:[#allocation12 + $0x180]]
        %v809 = vstv %s808
        %v810 = vmul.f32 %v662, %v809
        %s811 = sld [smem:[#allocation12 + $0x181]]
        %v812 = vstv %s811
        %v813 = vmul.f32 %v672, %v812
        %v815 = vrot.slane %v813, 5
        %v816 = vrot.slane %v815, 4
        %v818 = vadd.f32 %v810, %v816
        %s819 = sld [smem:[#allocation12 + $0x182]]
        %v820 = vstv %s819
        %v821 = vmul.f32 %v681, %v820
        %v823 = vrot.slane %v821, 6
        %v824 = vrot.slane %v823, 4
        %v826 = vadd.f32 %v818, %v824
        %s827 = sld [smem:[#allocation12 + $0x183]]
        %v828 = vstv %s827
        %v829 = vmul.f32 %v690, %v828
        %v831 = vrot.slane %v829, 7
        %v832 = vrot.slane %v831, 4
        %v834 = vadd.f32 %v826, %v832
        %s835 = sld [smem:[#allocation13 + $0x3]]
        %v836 = vstv %s835
        %v837 = vadd.f32 %v834, %v836
        %v838 = vmul.f32 %v837, 0.5
        %v839 = vmul.f32 %v837, 0.044715
        %v840 = vmul.f32 %v839, %v837
        %v841 = vmul.f32 %v840, %v837
        %v842 = vadd.f32 %v837, %v841
        %v843 = vmul.f32 %v842, 0.7978846
        %v844 = vtanh.pop %v843
        %v845 = vadd.f32 %v844, 1.0
        %v846 = vmul.f32 %v838, %v845
        %v847 = vadd.f32 %v729, %v768
        %v848 = vadd.f32 %v847, %v807
        %v849 = vadd.f32 %v848, %v846
        %v850 = vmul.f32 %v849, 0.25
        %v851 = vsub.f32 %v729, %v850
        %v852 = vsub.f32 %v768, %v850
        %v853 = vsub.f32 %v807, %v850
        %v854 = vsub.f32 %v846, %v850
        %v855 = vmul.f32 %v851, %v851
        %v856 = vmul.f32 %v852, %v852
        %v857 = vadd.f32 %v855, %v856
        %v858 = vmul.f32 %v853, %v853
        %v859 = vadd.f32 %v857, %v858
        %v860 = vmul.f32 %v854, %v854
        %v861 = vadd.f32 %v859, %v860
        %v862 = vmul.f32 %v861, 0.25
        %v863 = vadd.f32 %v862, 1e-06
        %v864 = vrsqrt.pop %v863
        %v865 = vmul.f32 %v851, %v864
        %s866 = sld [smem:[#allocation15]]
        %v867 = vstv %s866
        %v868 = vmul.f32 %v865, %v867
        %s869 = sld [smem:[#allocation16]]
        %v870 = vstv %s869
        %v871 = vadd.f32 %v868, %v870
        %v872 = vmul.f32 %v852, %v864
        %s873 = sld [smem:[#allocation15 + $0x1]]
        %v874 = vstv %s873
        %v875 = vmul.f32 %v872, %v874
        %s876 = sld [smem:[#allocation16 + $0x1]]
        %v877 = vstv %s876
        %v878 = vadd.f32 %v875, %v877
        %v879 = vmul.f32 %v853, %v864
        %s880 = sld [smem:[#allocation15 + $0x2]]
        %v881 = vstv %s880
        %v882 = vmul.f32 %v879, %v881
        %s883 = sld [smem:[#allocation16 + $0x2]]
        %v884 = vstv %s883
        %v885 = vadd.f32 %v882, %v884
        %v886 = vmul.f32 %v854, %v864
        %s887 = sld [smem:[#allocation15 + $0x3]]
        %v888 = vstv %s887
        %v889 = vmul.f32 %v886, %v888
        %s890 = sld [smem:[#allocation16 + $0x3]]
        %v891 = vstv %s890
        %v892 = vadd.f32 %v889, %v891
        %s893 = sld [smem:[#allocation18]]
        %v894 = vstv %s893
        %v895 = vmul.f32 %v871, %v894
        %s896 = sld [smem:[#allocation18 + $0x1]]
        %v897 = vstv %s896
        %v898 = vmul.f32 %v878, %v897
        %v899 = vadd.f32 %v895, %v898
        %s900 = sld [smem:[#allocation18 + $0x2]]
        %v901 = vstv %s900
        %v902 = vmul.f32 %v885, %v901
        %v903 = vadd.f32 %v899, %v902
        %s904 = sld [smem:[#allocation18 + $0x3]]
        %v905 = vstv %s904
        %v906 = vmul.f32 %v892, %v905
        %v907 = vadd.f32 %v903, %v906
        %s908 = sld [smem:[#allocation2]]
        %v909 = vstv %s908
        %v910 = vadd.f32 %v907, %v909
        %v911 = vmul.f32 %v910, %v729
        %v912 = vmul.f32 %v910, %v768
        %v913 = vmul.f32 %v910, %v807
        %v914 = vmul.f32 %v910, %v846
        %v915 = vld [vmem:[%s522] sm:$0xff]
        %s916 = sld [smem:[#allocation19]]
        %v917 = vstv %s916
        %v918 = vmul.f32 %v911, %v917
        %s919 = sld [smem:[#allocation19 + $0x1]]
        %v920 = vstv %s919
        %v921 = vmul.f32 %v912, %v920
        %v922 = vadd.f32 %v918, %v921
        %s923 = sld [smem:[#allocation19 + $0x2]]
        %v924 = vstv %s923
        %v925 = vmul.f32 %v913, %v924
        %v926 = vadd.f32 %v922, %v925
        %s927 = sld [smem:[#allocation19 + $0x3]]
        %v928 = vstv %s927
        %v929 = vmul.f32 %v914, %v928
        %v930 = vadd.f32 %v926, %v929
        %s931 = sld [smem:[#allocation21]]
        %v932 = vstv %s931
        %v933 = vadd.f32 %v930, %v932
        %v934 = vadd.f32 %v933, %v915
        %s935 = sld [smem:[#allocation19 + $0x80]]
        %v936 = vstv %s935
        %v937 = vmul.f32 %v911, %v936
        %s938 = sld [smem:[#allocation19 + $0x81]]
        %v939 = vstv %s938
        %v940 = vmul.f32 %v912, %v939
        %v941 = vadd.f32 %v937, %v940
        %s942 = sld [smem:[#allocation19 + $0x82]]
        %v943 = vstv %s942
        %v944 = vmul.f32 %v913, %v943
        %v945 = vadd.f32 %v941, %v944
        %s946 = sld [smem:[#allocation19 + $0x83]]
        %v947 = vstv %s946
        %v948 = vmul.f32 %v914, %v947
        %v949 = vadd.f32 %v945, %v948
        %s950 = sld [smem:[#allocation21 + $0x1]]
        %v951 = vstv %s950
        %v952 = vadd.f32 %v949, %v951
        %v954 = vrot.slane %v915, 5
        %v955 = vrot.slane %v954, 4
        %v957 = vadd.f32 %v952, %v955
        %s958 = sld [smem:[#allocation19 + $0x100]]
        %v959 = vstv %s958
        %v960 = vmul.f32 %v911, %v959
        %s961 = sld [smem:[#allocation19 + $0x101]]
        %v962 = vstv %s961
        %v963 = vmul.f32 %v912, %v962
        %v964 = vadd.f32 %v960, %v963
        %s965 = sld [smem:[#allocation19 + $0x102]]
        %v966 = vstv %s965
        %v967 = vmul.f32 %v913, %v966
        %v968 = vadd.f32 %v964, %v967
        %s969 = sld [smem:[#allocation19 + $0x103]]
        %v970 = vstv %s969
        %v971 = vmul.f32 %v914, %v970
        %v972 = vadd.f32 %v968, %v971
        %s973 = sld [smem:[#allocation21 + $0x2]]
        %v974 = vstv %s973
        %v975 = vadd.f32 %v972, %v974
        %v976 = vrot.slane %v915, 6
        %v977 = vrot.slane %v976, 4
        %v979 = vadd.f32 %v975, %v977
        %s980 = sld [smem:[#allocation19 + $0x180]]
        %v981 = vstv %s980
        %v982 = vmul.f32 %v911, %v981
        %s983 = sld [smem:[#allocation19 + $0x181]]
        %v984 = vstv %s983
        %v985 = vmul.f32 %v912, %v984
        %v986 = vadd.f32 %v982, %v985
        %s987 = sld [smem:[#allocation19 + $0x182]]
        %v988 = vstv %s987
        %v989 = vmul.f32 %v913, %v988
        %v990 = vadd.f32 %v986, %v989
        %s991 = sld [smem:[#allocation19 + $0x183]]
        %v992 = vstv %s991
        %v993 = vmul.f32 %v914, %v992
        %v994 = vadd.f32 %v990, %v993
        %s995 = sld [smem:[#allocation21 + $0x3]]
        %v996 = vstv %s995
        %v997 = vadd.f32 %v994, %v996
        %v998 = vrot.slane %v915, 7
        %v999 = vrot.slane %v998, 4
        %v1001 = vadd.f32 %v997, %v999
        %v1003 = vlaneseq
        %v1004 = vshrl.u32 %v1003, 7
        %v1005 = vsub.s32 0, %v1004
        %v1006 = vrot.slane %v934, %v1005
        %v1007 = vlaneseq
        %v1008 = vshrl.u32 %v1007, 7
        %v1009 = vsub.s32 4, %v1008
        %v1010 = vrot.slane %v934, %v1009
        %v1014 = vlaneseq
        %v1015 = vshrl.u32 %v1014, 7
        %v1016 = vsub.s32 0, %v1015
        %v1017 = vrot.slane %v957, %v1016
        %v1018 = vlaneseq
        %v1019 = vshrl.u32 %v1018, 7
        %v1020 = vsub.s32 4, %v1019
        %v1021 = vrot.slane %v957, %v1020
        %v1025 = vlaneseq
        %v1026 = vshrl.u32 %v1025, 7
        %v1027 = vsub.s32 0, %v1026
        %v1028 = vrot.slane %v979, %v1027
        %v1029 = vlaneseq
        %v1030 = vshrl.u32 %v1029, 7
        %v1031 = vsub.s32 4, %v1030
        %v1032 = vrot.slane %v979, %v1031
        %v1036 = vlaneseq
        %v1037 = vshrl.u32 %v1036, 7
        %v1038 = vsub.s32 0, %v1037
        %v1039 = vrot.slane %v1001, %v1038
        %v1040 = vlaneseq
        %v1041 = vshrl.u32 %v1040, 7
        %v1042 = vsub.s32 4, %v1041
        %v1043 = vrot.slane %v1001, %v1042
        %vm1046 = vcmask 1040384
        %v1047 = vsel %vm1046, %v1006, %v1017
        %v1048 = vsel %vm1046, %v1010, %v1021
        %vm1049 = vcmask 1041408
        %v1050 = vsel %vm1049, %v1047, %v1028
        %v1051 = vsel %vm1049, %v1048, %v1032
        %vm1052 = vcmask 1042432
        %v1053 = vsel %vm1052, %v1050, %v1039
        %v1054 = vsel %vm1052, %v1051, %v1043
        %v1057 = vcombine.low %v1053, %v1054
        %1059 = vst [vmem:[%s604] sm:$0xff] %v1057
        %s1060 = sand.u32 %s326, 1
        %s1061 = scalar_lea.sflag [#allocation5], %s1060
        %s1062 = sand.u32 %s326, 1
        %s1063 = smul.addr %s1062, 8
        %s1064 = scalar_lea.vmem [#allocation22], %s1063
        // Predicated region
        $region113: #{tpu_custom_call.1} parent=67 // pred_check
          %p1065 = pneg %p336
        $region114: #{tpu_custom_call.1} parent=67 // pred_check_branch
          %1067 = sbr.rel (%p1065) target = $region116
        $region115: #{tpu_custom_call.1} parent=67 // pred_region
          %s1068 = smul.u32 2, %s43
          %s1070 = ssub.s32 128, 128
          %1071 = vsyncadd %s1061, %s1070
          %s1072 = smul.addr %s42, 2
          %s1073 = sadd.s32 %s1068, %s1072
          %s1074 = smul.addr %s1073, 64
          %s1075 = scalar_lea.hbm %s12, %s1074
          %s1077 = sshll.u32 %s1064, 4
          %s1078 = int_to_ptr.vmem [resolvable:$true] %s1077
          %1080 = dma.vmem_to_hbm [thread:$0]  %s1078, 128, %s1075, %s1061
        $region116: #{tpu_custom_call.1} parent=67 // pred_fallthru
          _
      $region68: #{tpu_custom_call.1} parent=5 // pred_fallthru
        _
      %p1081 = scmp.le.s32.totalorder 2, %s33
      // Predicated region
      $region117: #{tpu_custom_call.1} parent=5 // pred_check
        %p1082 = pneg %p1081
      $region118: #{tpu_custom_call.1} parent=5 // pred_check_branch
        %1084 = sbr.rel (%p1082) target = $region120
      $region119: #{tpu_custom_call.1} parent=5 // pred_region
        %s1085 = ssub.s32 %s33, 2
        // Predicated region
        $region121: #{tpu_custom_call.1} parent=119 // pred_check
          %p1086 = pneg %p342
        $region122: #{tpu_custom_call.1} parent=119 // pred_check_branch
          %1088 = sbr.rel (%p1086) target = $region124
        $region123: #{tpu_custom_call.1} parent=119 // pred_region
          %s1089 = sand.u32 %s327, 1
          %s1090 = scalar_lea.sflag [#allocation5], %s1089
          %s1091 = sand.u32 %s327, 1
          %s1092 = smul.addr %s1091, 8
          %s1093 = scalar_lea.vmem [#allocation22], %s1092
          %1094 = dma.done %s1090, 128
        $region124: #{tpu_custom_call.1} parent=119 // pred_fallthru
          _
      $region120: #{tpu_custom_call.1} parent=5 // pred_fallthru
        _
    $region6: #{tpu_custom_call.1} parent=1 // loop_footer
      %s37 = sadd.s32 1, %s33
    $region7: #{tpu_custom_call.1} parent=1 // loop_footer_branch
      %32 = sbr.rel target = $region3
    $region8: #{tpu_custom_call.1} parent=1 // loop_exit
      _
    %1095 = vsyncpa [#allocation4], 1
    %s1096 = scalar_lea.sflag [#allocation4], 1
    %1097 = vsyncpa %s1096, 1
    %1098 = vsyncpa [#allocation8], 1
    %s1099 = scalar_lea.sflag [#allocation8], 1
    %1100 = vsyncpa %s1099, 1
    %1101 = vsyncpa [#allocation5], 1
    %s1102 = scalar_lea.sflag [#allocation5], 1
    %1103 = vsyncpa %s1102, 1
    %1104 = vsyncpa [#allocation6], 1
    %s1105 = scalar_lea.sflag [#allocation6], 1
    %1106 = vsyncpa %s1105, 1
    %1107 = vsyncpa [#allocation11], 1
    %1108 = vsyncpa [#allocation14], 1
    %1109 = vsyncpa [#allocation17], 1
    %1110 = vsyncpa [#allocation20], 1

</llo_original>
